<compile_context>
chip_gen: v5e
topology: v5e:2x2
jax: 0.10.0
libtpu: 0.0.40
codegen_flags: <defaults>
</compile_context>

<pallas_src>
import functools

import jax
import jax.numpy as jnp
import numpy as np
from jax.experimental import pallas as pl
from jax.experimental.pallas import tpu as pltpu

C = 3  # in/out channels of the 1x1 conv


def _fused_kernel(a_ref, bwt_ref, bcol_ref, rw_ref, x_ref, o_ref, *, precision):
    """conv1x1 + AvgPool3d(3,1,1) + hardswish-ish, fused as two matmuls + epilogue.

    a_ref   : (Mo, Mi)     VMEM  channel-mix x row-pool matrix (1/27 folded in)
    bwt_ref : (W, Wp)      VMEM  0/1 column-pool band matrix
    bcol_ref: (Mo, 1)      VMEM  conv-bias * row-valid-count / 27 per output row
    rw_ref  : (1, Wp)      VMEM  column valid-pool counts
    x_ref   : (1, Mi, W)   VMEM  stacked input rows (batch*channel*H, W)
    o_ref   : (1, Mo, Wp)  VMEM  stacked output rows (batch*channel*Hp, Wp)
    """
    # Row pool (and channel mix) first: (Mo, Mi) @ (Mi, W) keeps the intermediate narrow.
    rowpooled = jnp.dot(a_ref[...], x_ref[0],
                        preferred_element_type=jnp.float32, precision=precision)   # (Mo, W)
    pooled = jnp.dot(rowpooled, bwt_ref[...],
                     preferred_element_type=jnp.float32, precision=precision)      # (Mo, Wp)
    t1 = pooled + bcol_ref[...] * rw_ref[...]   # AvgPool3d output (divisor 27 folded in)
    t4 = jnp.clip(t1 + 3.0, 0.0, 6.0)
    o_ref[0] = t1 * t4 * (1.0 / 6.0)


def model_forward(x, conv_weight, conv_bias, merge_batch=None):
    """x: (N, 3, H, W) float32 NCHW.  Returns (N, 3, H+2, W+2, 1) float32."""
    N, Cin, H, W = x.shape
    assert Cin == C
    Hp, Wp = H + 2, W + 2

    if merge_batch is None:
        # v5e/v6e: single TensorCore -> fold the whole batch into one grid step (kills
        # per-step overhead).  v7x: 2 TCs -> keep the batch as a "parallel" grid axis.
        try:
            kind = jax.devices()[0].device_kind.lower()
        except Exception:
            kind = ""
        two_tc = ("v7" in kind) or ("7x" in kind)
        merge_batch = (N == 1) or (not two_tc)

    G, Nb = ((1, N) if merge_batch else (N, 1))
    Mi, Mo = Nb * C * H, Nb * C * Hp

    w2d = conv_weight.reshape(C, C).astype(jnp.float32)   # (out, in) of the 1x1 conv
    b1d = conv_bias.astype(jnp.float32)

    # --- Fold the channel (depth) window of the AvgPool3d into conv weights/bias. ---
    cc = np.zeros((C, C), np.float32)
    for c in range(C):
        cc[c, max(0, c - 1):min(C, c + 2)] = 1.0
    wf = jnp.asarray(cc) @ w2d      # (C, C)
    bf = jnp.asarray(cc) @ b1d      # (C,)

    # --- Banded pooling matrices (absorb conv padding=1 AND pool padding=1). ---
    hh = np.arange(Hp)[:, None]
    jj = np.arange(H)[None, :]
    bh = ((jj >= hh - 2) & (jj <= hh)).astype(np.float32)                # (Hp, H)
    ww = np.arange(Wp)[None, :]
    kk = np.arange(W)[:, None]
    bwt = jnp.asarray(((kk >= ww - 2) & (kk <= ww)).astype(np.float32))  # (W, Wp)

    # Stage-1 matrix: channel mix x row pool x (1/27), block-diagonal over the batch
    # elements handled within one grid step.
    a_block = jnp.kron(wf, jnp.asarray(bh)) * (1.0 / 27.0)               # (C*Hp, C*H)
    a_mat = jnp.kron(jnp.eye(Nb, dtype=jnp.float32), a_block) if Nb > 1 else a_block

    # Bias term: bf[c] * (#valid pool rows) * (#valid pool cols) / 27 as an outer product.
    rh = np.full((Hp,), 3.0, np.float32); rh[0] = 2.0; rh[-1] = 2.0
    rw = np.full((Wp,), 3.0, np.float32); rw[0] = 2.0; rw[-1] = 2.0
    bcol = jnp.tile(
        (bf[:, None] * jnp.asarray(rh)[None, :] * (1.0 / 27.0)).reshape(C * Hp, 1),
        (Nb, 1))                                                          # (Mo, 1)
    rw_row = jnp.asarray(rw)[None, :]                                     # (1, Wp)

    # Contiguous reshape (no copy): rows ordered (batch, channel, H).
    x_stacked = x.astype(jnp.float32).reshape(G, Mi, W)

    def run(precision):
        kernel = functools.partial(_fused_kernel, precision=precision)
        return pl.pallas_call(
            kernel,
            out_shape=jax.ShapeDtypeStruct((G, Mo, Wp), jnp.float32),
            grid=(G,),
            in_specs=[
                # Grid-invariant operands (constant index maps): the pipeline keeps the
                # resident VMEM copy across steps instead of re-DMA'ing per element.
                pl.BlockSpec((Mo, Mi), lambda g: (0, 0)),
                pl.BlockSpec((W, Wp), lambda g: (0, 0)),
                pl.BlockSpec((Mo, 1), lambda g: (0, 0)),
                pl.BlockSpec((1, Wp), lambda g: (0, 0)),
                pl.BlockSpec((1, Mi, W), lambda g: (g, 0, 0)),
            ],
            out_specs=pl.BlockSpec((1, Mo, Wp), lambda g: (g, 0, 0)),
            compiler_params=pltpu.CompilerParams(dimension_semantics=("parallel",)),
        )(a_mat, bwt, bcol, rw_row, x_stacked)

    try:
        out = run(jax.lax.Precision.HIGH)      # bf16_3x: ~f32 accuracy, fewer MXU passes
    except Exception:
        out = run(jax.lax.Precision.HIGHEST)   # fallback if lowering rejects HIGH

    # (G, Mo, Wp) -> (N, C, Hp, Wp, 1): leading-dim split + trailing unsqueeze are
    # contiguous reshapes (no extra HBM pass).
    return out.reshape(N, C, Hp, Wp)[..., None]


def reference(x, conv_weight, conv_bias):
    """Pure-JAX reference matching the PyTorch forward on 4-D input."""
    N, Cin, H, W = x.shape
    w2d = conv_weight.reshape(C, C)
    xp = jnp.pad(x, ((0, 0), (0, 0), (1, 1), (1, 1)))
    v1 = jnp.einsum('oc,nchw->nohw', w2d, xp) + conv_bias[None, :, None, None]
    vp = jnp.pad(v1, ((0, 0), (1, 1), (1, 1), (1, 1)))
    Hp, Wp = H + 2, W + 2
    acc = jnp.zeros_like(v1)
    for dc in range(3):
        for dh in range(3):
            for dw in range(3):
                acc = acc + vp[:, dc:dc + C, dh:dh + Hp, dw:dw + Wp]
    t1 = acc / 27.0
    t4 = jnp.clip(t1 + 3.0, 0.0, 6.0)
    return (t1 * t4 / 6.0)[..., None]


if __name__ == "__main__":
    key = jax.random.PRNGKey(0)
    kx, kw, kb = jax.random.split(key, 3)

    # Small deterministic inputs / parameters (PyTorch shapes: weight (3,3,1,1), bias (3,)).
    x = jax.random.normal(kx, (2, C, 16, 16), dtype=jnp.float32)
    conv_weight = jax.random.normal(kw, (C, C, 1, 1), dtype=jnp.float32) * 0.5
    conv_bias = jax.random.normal(kb, (C,), dtype=jnp.float32) * 0.1

    ref = jax.block_until_ready(reference(x, conv_weight, conv_bias))

    # Exercise both batch layouts (merged single-step and per-batch grid) so the script
    # validates whichever path the device-kind heuristic selects on this machine.
    for merge in (True, False):
        out = jax.block_until_ready(
            model_forward(x, conv_weight, conv_bias, merge_batch=merge))
        assert out.shape == (2, C, 18, 18, 1), out.shape
        np.testing.assert_allclose(np.asarray(out), np.asarray(ref), rtol=1e-4, atol=1e-4)

    # Device-adaptive default path.
    out = jax.block_until_ready(model_forward(x, conv_weight, conv_bias))
    np.testing.assert_allclose(np.asarray(out), np.asarray(ref), rtol=1e-4, atol=1e-4)
    print("KERNEL_OK")
</pallas_src>

<mosaic_0001>
module attributes {stable_mosaic.version = 11 : i64} {
  func.func @_fused_kernel(%arg0: i32, %arg1: memref<108x96xf32, #tpu.memory_space<vmem>>, %arg2: memref<16x18xf32, #tpu.memory_space<vmem>>, %arg3: memref<108x1xf32, #tpu.memory_space<vmem>>, %arg4: memref<1x18xf32, #tpu.memory_space<vmem>>, %arg5: memref<1x96x16xf32, #tpu.memory_space<vmem>>, %arg6: memref<1x108x18xf32, #tpu.memory_space<vmem>>) attributes {dimension_semantics = [#tpu.dimension_semantics<parallel>], iteration_bounds = array<i64: 1>, scalar_prefetch = 0 : i64, scratch_operands = 0 : i64, tpu.core_type = #tpu.core_type<tc>, window_params = [{pipeline_mode = #tpu.pipeline_mode<synchronous>, transform_indices = @transform_0, window_bounds = array<i64: 108, 96>}, {pipeline_mode = #tpu.pipeline_mode<synchronous>, transform_indices = @transform_1, window_bounds = array<i64: 16, 18>}, {pipeline_mode = #tpu.pipeline_mode<synchronous>, transform_indices = @transform_2, window_bounds = array<i64: 108, 1>}, {pipeline_mode = #tpu.pipeline_mode<synchronous>, transform_indices = @transform_3, window_bounds = array<i64: 1, 18>}, {transform_indices = @transform_4, window_bounds = array<i64: 1, 96, 16>}, {transform_indices = @transform_5, window_bounds = array<i64: 1, 108, 18>}]} {
    %c0 = arith.constant 0 : index
    %c0_0 = arith.constant 0 : index
    %0 = vector.load %arg1[%c0, %c0_0] : memref<108x96xf32, #tpu.memory_space<vmem>>, vector<108x96xf32>
    %c0_1 = arith.constant 0 : index
    %c0_2 = arith.constant 0 : index
    %c0_3 = arith.constant 0 : index
    %1 = vector.load %arg5[%c0_1, %c0_2, %c0_3] : memref<1x96x16xf32, #tpu.memory_space<vmem>>, vector<1x96x16xf32>
    %2 = vector.shape_cast %1 : vector<1x96x16xf32> to vector<96x16xf32>
    %cst = arith.constant dense<0.000000e+00> : vector<108x16xf32>
    %3 = tpu.matmul %0, %2, %cst {dimension_numbers = #tpu.dot_dimension_numbers<[1], [0], [0], [1], [0, 0, 1, 1], [], []>, precision = #tpu.contract_precision<fp32>} : vector<108x96xf32>, vector<96x16xf32>, vector<108x16xf32> -> vector<108x16xf32>
    %c0_4 = arith.constant 0 : index
    %c0_5 = arith.constant 0 : index
    %4 = vector.load %arg2[%c0_4, %c0_5] : memref<16x18xf32, #tpu.memory_space<vmem>>, vector<16x18xf32>
    %cst_6 = arith.constant dense<0.000000e+00> : vector<108x18xf32>
    %5 = tpu.matmul %3, %4, %cst_6 {dimension_numbers = #tpu.dot_dimension_numbers<[1], [0], [0], [1], [0, 0, 1, 1], [], []>, precision = #tpu.contract_precision<fp32>} : vector<108x16xf32>, vector<16x18xf32>, vector<108x18xf32> -> vector<108x18xf32>
    %c0_7 = arith.constant 0 : index
    %c0_8 = arith.constant 0 : index
    %6 = vector.load %arg3[%c0_7, %c0_8] : memref<108x1xf32, #tpu.memory_space<vmem>>, vector<108x1xf32>
    %c0_9 = arith.constant 0 : index
    %c0_10 = arith.constant 0 : index
    %7 = vector.load %arg4[%c0_9, %c0_10] : memref<1x18xf32, #tpu.memory_space<vmem>>, vector<1x18xf32>
    %8 = vector.broadcast %6 : vector<108x1xf32> to vector<108x18xf32>
    %9 = vector.broadcast %7 : vector<1x18xf32> to vector<108x18xf32>
    %10 = arith.mulf %8, %9 : vector<108x18xf32>
    %11 = arith.addf %5, %10 : vector<108x18xf32>
    %cst_11 = arith.constant 3.000000e+00 : f32
    %12 = vector.broadcast %cst_11 : f32 to vector<108x18xf32>
    %13 = arith.addf %11, %12 : vector<108x18xf32>
    %cst_12 = arith.constant 0.000000e+00 : f32
    %cst_13 = arith.constant 6.000000e+00 : f32
    %14 = vector.broadcast %cst_12 : f32 to vector<108x18xf32>
    %15 = arith.maximumf %14, %13 : vector<108x18xf32>
    %16 = vector.broadcast %cst_13 : f32 to vector<108x18xf32>
    %17 = arith.minimumf %16, %15 : vector<108x18xf32>
    %18 = arith.mulf %11, %17 : vector<108x18xf32>
    %cst_14 = arith.constant 0.166666672 : f32
    %19 = vector.broadcast %cst_14 : f32 to vector<108x18xf32>
    %20 = arith.mulf %18, %19 : vector<108x18xf32>
    %c0_15 = arith.constant 0 : index
    %c0_16 = arith.constant 0 : index
    %c0_17 = arith.constant 0 : index
    %21 = vector.load %arg6[%c0_15, %c0_16, %c0_17] : memref<1x108x18xf32, #tpu.memory_space<vmem>>, vector<1x108x18xf32>
    %22 = vector.shape_cast %21 : vector<1x108x18xf32> to vector<108x18xf32>
    %23 = vector.shape_cast %20 : vector<108x18xf32> to vector<1x108x18xf32>
    tpu.vector_store %arg6[%c0_15, %c0_16, %c0_17], %23 {strides = array<i32>} : memref<1x108x18xf32, #tpu.memory_space<vmem>>, vector<1x108x18xf32>,
    return
  }
  func.func @transform_0(%arg0: i32) -> (i32, i32) {
    %c0_i32 = arith.constant 0 : i32
    %c0_i32_0 = arith.constant 0 : i32
    %c0_i32_1 = arith.constant 0 : i32
    return %c0_i32, %c0_i32_0 : i32, i32
  }
  func.func @transform_1(%arg0: i32) -> (i32, i32) {
    %c0_i32 = arith.constant 0 : i32
    %c0_i32_0 = arith.constant 0 : i32
    %c0_i32_1 = arith.constant 0 : i32
    return %c0_i32, %c0_i32_0 : i32, i32
  }
  func.func @transform_2(%arg0: i32) -> (i32, i32) {
    %c0_i32 = arith.constant 0 : i32
    %c0_i32_0 = arith.constant 0 : i32
    %c0_i32_1 = arith.constant 0 : i32
    return %c0_i32, %c0_i32_0 : i32, i32
  }
  func.func @transform_3(%arg0: i32) -> (i32, i32) {
    %c0_i32 = arith.constant 0 : i32
    %c0_i32_0 = arith.constant 0 : i32
    %c0_i32_1 = arith.constant 0 : i32
    return %c0_i32, %c0_i32_0 : i32, i32
  }
  func.func @transform_4(%arg0: i32) -> (i32, i32, i32) {
    %c0_i32 = arith.constant 0 : i32
    %c0_i32_0 = arith.constant 0 : i32
    %c0_i32_1 = arith.constant 0 : i32
    return %arg0, %c0_i32, %c0_i32_0 : i32, i32, i32
  }
  func.func @transform_5(%arg0: i32) -> (i32, i32, i32) {
    %c0_i32 = arith.constant 0 : i32
    %c0_i32_0 = arith.constant 0 : i32
    %c0_i32_1 = arith.constant 0 : i32
    return %arg0, %c0_i32, %c0_i32_0 : i32, i32, i32
  }
}

</mosaic_0001>

<llo_original>
// kernel: tpu_custom_call.1
$region0: #{tpu_custom_call.1}
  #allocation0 [shape = 'u32[]', space=smem, size = 0x4, offset = 0x4, fixed_abs, tag = 'smem constant byte address 0x4 - core index']
  #allocation1 [shape = 'u32[72,128]{1,0:T(1,128)}', space=vmem, size = 0x9000, scoped, tag = 'internal scratch']
  %s0 = inlined_call_operand.vmem [shape: f32[108,96], index: 0, kind: input, shape index: {}]
  %s1 = inlined_call_operand.vmem [shape: f32[16,18], index: 1, kind: input, shape index: {}]
  %s2 = inlined_call_operand.vmem [shape: f32[108,1], index: 2, kind: input, shape index: {}]
  %s3 = inlined_call_operand.vmem [shape: f32[1,18], index: 3, kind: input, shape index: {}]
  %s4 = inlined_call_operand.vmem [shape: f32[1,96,16], index: 4, kind: input, shape index: {}]
  %s5 = inlined_call_operand.vmem [shape: f32[1,108,18], index: 5, kind: output, shape index: {}]
  %s6 = sld [smem:[#allocation0]]
  $region30: #{tpu_custom_call.1} parent=0
    _
  %s8 = ssub.s32 1, %s6
  %s9 = scalar_select 0, %s8, %s6
  // Predicated region
  $region2: #{tpu_custom_call.1} parent=0 // pred_check
    _
  $region3: #{tpu_custom_call.1} parent=0 // pred_check_branch
    %11 = sbr.rel (0) target = $region5
  $region4: #{tpu_custom_call.1} parent=0 // pred_region
    _
  $region5: #{tpu_custom_call.1} parent=0 // pred_fallthru
    _
  // Predicated region
  $region6: #{tpu_custom_call.1} parent=0 // pred_check
    _
  $region7: #{tpu_custom_call.1} parent=0 // pred_check_branch
    %13 = sbr.rel (0) target = $region9
  $region8: #{tpu_custom_call.1} parent=0 // pred_region
    _
  $region9: #{tpu_custom_call.1} parent=0 // pred_fallthru
    _
  // Predicated region
  $region10: #{tpu_custom_call.1} parent=0 // pred_check
    _
  $region11: #{tpu_custom_call.1} parent=0 // pred_check_branch
    %15 = sbr.rel (0) target = $region13
  $region12: #{tpu_custom_call.1} parent=0 // pred_region
    _
  $region13: #{tpu_custom_call.1} parent=0 // pred_fallthru
    _
  // Predicated region
  $region14: #{tpu_custom_call.1} parent=0 // pred_check
    _
  $region15: #{tpu_custom_call.1} parent=0 // pred_check_branch
    %17 = sbr.rel (0) target = $region17
  $region16: #{tpu_custom_call.1} parent=0 // pred_region
    _
  $region17: #{tpu_custom_call.1} parent=0 // pred_fallthru
    _
  // Predicated region
  $region18: #{tpu_custom_call.1} parent=0 // pred_check
    _
  $region19: #{tpu_custom_call.1} parent=0 // pred_check_branch
    %19 = sbr.rel (0) target = $region21
  $region20: #{tpu_custom_call.1} parent=0 // pred_region
    _
  $region21: #{tpu_custom_call.1} parent=0 // pred_fallthru
    _
  %v20 = vld [vmem:[%s0] sm:$0xff]
  %v21 = vld [vmem:[%s0 + $0x8] sm:$0xff]
  %v22 = vld [vmem:[%s0 + $0x10] sm:$0xff]
  %v23 = vld [vmem:[%s0 + $0x18] sm:$0xff]
  %v24 = vld [vmem:[%s0 + $0x20] sm:$0xff]
  %v25 = vld [vmem:[%s0 + $0x28] sm:$0xff]
  %v26 = vld [vmem:[%s0 + $0x30] sm:$0xff]
  %v27 = vld [vmem:[%s0 + $0x38] sm:$0xff]
  %v28 = vld [vmem:[%s0 + $0x40] sm:$0xff]
  %v29 = vld [vmem:[%s0 + $0x48] sm:$0xff]
  %v30 = vld [vmem:[%s0 + $0x50] sm:$0xff]
  %v31 = vld [vmem:[%s0 + $0x58] sm:$0xff]
  %v32 = vld [vmem:[%s0 + $0x60] sm:$0xff]
  %v33 = vld [vmem:[%s0 + $0x68] sm:$0xf]
  %v34 = vld [vmem:[%s4] sm:$0xff]
  %v35 = vld [vmem:[%s4 + $0x8] sm:$0xff]
  %v36 = vld [vmem:[%s4 + $0x10] sm:$0xff]
  %v37 = vld [vmem:[%s4 + $0x18] sm:$0xff]
  %v38 = vld [vmem:[%s4 + $0x20] sm:$0xff]
  %v39 = vld [vmem:[%s4 + $0x28] sm:$0xff]
  %v40 = vld [vmem:[%s4 + $0x30] sm:$0xff]
  %v41 = vld [vmem:[%s4 + $0x38] sm:$0xff]
  %v42 = vld [vmem:[%s4 + $0x40] sm:$0xff]
  %v43 = vld [vmem:[%s4 + $0x48] sm:$0xff]
  %v44 = vld [vmem:[%s4 + $0x50] sm:$0xff]
  %v45 = vld [vmem:[%s4 + $0x58] sm:$0xff]
  %vm46 = vcmask 785408
  %v48 = vsel %vm46, %v20, 0
  %v51 = vsel %vm46, %v21, 0
  %v54 = vsel %vm46, %v22, 0
  %v57 = vsel %vm46, %v23, 0
  %v60 = vsel %vm46, %v24, 0
  %v63 = vsel %vm46, %v25, 0
  %v66 = vsel %vm46, %v26, 0
  %v69 = vsel %vm46, %v27, 0
  %v72 = vsel %vm46, %v28, 0
  %v75 = vsel %vm46, %v29, 0
  %v78 = vsel %vm46, %v30, 0
  %v81 = vsel %vm46, %v31, 0
  %v84 = vsel %vm46, %v32, 0
  %v87 = vsel %vm46, %v33, 0
  %89 = vmatpush.msra.mxu0 0.0
  %90 = vmatpush.msra.mxu0 0.0
  %91 = vmatpush.msra.mxu0 0.0
  %92 = vmatpush.msra.mxu0 0.0
  %v93 = vand.u32 %v45, 4294901760
  %94 = vmatpush.msra.mxu0 %v93
  %v95 = vand.u32 %v44, 4294901760
  %96 = vmatpush.msra.mxu0 %v95
  %v97 = vand.u32 %v43, 4294901760
  %98 = vmatpush.msra.mxu0 %v97
  %v99 = vand.u32 %v42, 4294901760
  %100 = vmatpush.msra.mxu0 %v99
  %v101 = vand.u32 %v41, 4294901760
  %102 = vmatpush.msra.mxu0 %v101
  %v103 = vand.u32 %v40, 4294901760
  %104 = vmatpush.msra.mxu0 %v103
  %v105 = vand.u32 %v39, 4294901760
  %106 = vmatpush.msra.mxu0 %v105
  %v107 = vand.u32 %v38, 4294901760
  %108 = vmatpush.msra.mxu0 %v107
  %v109 = vand.u32 %v37, 4294901760
  %110 = vmatpush.msra.mxu0 %v109
  %v111 = vand.u32 %v36, 4294901760
  %112 = vmatpush.msra.mxu0 %v111
  %v113 = vand.u32 %v35, 4294901760
  %114 = vmatpush.msra.mxu0 %v113
  %v115 = vand.u32 %v34, 4294901760
  %116 = vmatpush.msra.mxu0 %v115
  %v117 = vand.u32 %v48, 4294901760
  %v118 = vsub.f32 %v48, %v117
  %v119 = vand.u32 %v118, 4294901760
  %v120 = vsub.f32 %v118, %v119
  %v121 = vand.u32 %v120, 4294901760
  %122 = vmatmul.f32.gmra.mxu0 %v121
  %v123 = vpop.f32.mrf.mxu0
  %v124 = vadd.f32 0.0, %v123
  %v125 = vand.u32 %v51, 4294901760
  %v126 = vsub.f32 %v51, %v125
  %v127 = vand.u32 %v126, 4294901760
  %v128 = vsub.f32 %v126, %v127
  %v129 = vand.u32 %v128, 4294901760
  %130 = vmatmul.f32.gmra.mxu0 %v129
  %v131 = vpop.f32.mrf.mxu0
  %v132 = vadd.f32 0.0, %v131
  %v133 = vand.u32 %v54, 4294901760
  %v134 = vsub.f32 %v54, %v133
  %v135 = vand.u32 %v134, 4294901760
  %v136 = vsub.f32 %v134, %v135
  %v137 = vand.u32 %v136, 4294901760
  %138 = vmatmul.f32.gmra.mxu0 %v137
  %v139 = vpop.f32.mrf.mxu0
  %v140 = vadd.f32 0.0, %v139
  %v141 = vand.u32 %v57, 4294901760
  %v142 = vsub.f32 %v57, %v141
  %v143 = vand.u32 %v142, 4294901760
  %v144 = vsub.f32 %v142, %v143
  %v145 = vand.u32 %v144, 4294901760
  %146 = vmatmul.f32.gmra.mxu0 %v145
  %v147 = vpop.f32.mrf.mxu0
  %v148 = vadd.f32 0.0, %v147
  %v149 = vand.u32 %v60, 4294901760
  %v150 = vsub.f32 %v60, %v149
  %v151 = vand.u32 %v150, 4294901760
  %v152 = vsub.f32 %v150, %v151
  %v153 = vand.u32 %v152, 4294901760
  %154 = vmatmul.f32.gmra.mxu0 %v153
  %v155 = vpop.f32.mrf.mxu0
  %v156 = vadd.f32 0.0, %v155
  %v157 = vand.u32 %v63, 4294901760
  %v158 = vsub.f32 %v63, %v157
  %v159 = vand.u32 %v158, 4294901760
  %v160 = vsub.f32 %v158, %v159
  %v161 = vand.u32 %v160, 4294901760
  %162 = vmatmul.f32.gmra.mxu0 %v161
  %v163 = vpop.f32.mrf.mxu0
  %v164 = vadd.f32 0.0, %v163
  %v165 = vand.u32 %v66, 4294901760
  %v166 = vsub.f32 %v66, %v165
  %v167 = vand.u32 %v166, 4294901760
  %v168 = vsub.f32 %v166, %v167
  %v169 = vand.u32 %v168, 4294901760
  %170 = vmatmul.f32.gmra.mxu0 %v169
  %v171 = vpop.f32.mrf.mxu0
  %v172 = vadd.f32 0.0, %v171
  %v173 = vand.u32 %v69, 4294901760
  %v174 = vsub.f32 %v69, %v173
  %v175 = vand.u32 %v174, 4294901760
  %v176 = vsub.f32 %v174, %v175
  %v177 = vand.u32 %v176, 4294901760
  %178 = vmatmul.f32.gmra.mxu0 %v177
  %v179 = vpop.f32.mrf.mxu0
  %v180 = vadd.f32 0.0, %v179
  %v181 = vand.u32 %v72, 4294901760
  %v182 = vsub.f32 %v72, %v181
  %v183 = vand.u32 %v182, 4294901760
  %v184 = vsub.f32 %v182, %v183
  %v185 = vand.u32 %v184, 4294901760
  %186 = vmatmul.f32.gmra.mxu0 %v185
  %v187 = vpop.f32.mrf.mxu0
  %v188 = vadd.f32 0.0, %v187
  %v189 = vand.u32 %v75, 4294901760
  %v190 = vsub.f32 %v75, %v189
  %v191 = vand.u32 %v190, 4294901760
  %v192 = vsub.f32 %v190, %v191
  %v193 = vand.u32 %v192, 4294901760
  %194 = vmatmul.f32.gmra.mxu0 %v193
  %v195 = vpop.f32.mrf.mxu0
  %v196 = vadd.f32 0.0, %v195
  %v197 = vand.u32 %v78, 4294901760
  %v198 = vsub.f32 %v78, %v197
  %v199 = vand.u32 %v198, 4294901760
  %v200 = vsub.f32 %v198, %v199
  %v201 = vand.u32 %v200, 4294901760
  %202 = vmatmul.f32.gmra.mxu0 %v201
  %v203 = vpop.f32.mrf.mxu0
  %v204 = vadd.f32 0.0, %v203
  %v205 = vand.u32 %v81, 4294901760
  %v206 = vsub.f32 %v81, %v205
  %v207 = vand.u32 %v206, 4294901760
  %v208 = vsub.f32 %v206, %v207
  %v209 = vand.u32 %v208, 4294901760
  %210 = vmatmul.f32.gmra.mxu0 %v209
  %v211 = vpop.f32.mrf.mxu0
  %v212 = vadd.f32 0.0, %v211
  %v213 = vand.u32 %v84, 4294901760
  %v214 = vsub.f32 %v84, %v213
  %v215 = vand.u32 %v214, 4294901760
  %v216 = vsub.f32 %v214, %v215
  %v217 = vand.u32 %v216, 4294901760
  %218 = vmatmul.f32.gmra.mxu0 %v217
  %v219 = vpop.f32.mrf.mxu0
  %v220 = vadd.f32 0.0, %v219
  %v221 = vand.u32 %v87, 4294901760
  %v222 = vsub.f32 %v87, %v221
  %v223 = vand.u32 %v222, 4294901760
  %v224 = vsub.f32 %v222, %v223
  %v225 = vand.u32 %v224, 4294901760
  %226 = vmatmul.f32.gmra.mxu0 %v225
  %v227 = vpop.f32.mrf.mxu0
  %v228 = vadd.f32 0.0, %v227
  %229 = vdwg.mxu0
  %230 = vmatpush.msra.mxu0 0.0
  %231 = vmatpush.msra.mxu0 0.0
  %232 = vmatpush.msra.mxu0 0.0
  %233 = vmatpush.msra.mxu0 0.0
  %v234 = vand.u32 %v45, 4294901760
  %v235 = vsub.f32 %v45, %v234
  %v236 = vand.u32 %v235, 4294901760
  %v237 = vsub.f32 %v235, %v236
  %v238 = vand.u32 %v237, 4294901760
  %239 = vmatpush.msra.mxu0 %v238
  %v240 = vand.u32 %v44, 4294901760
  %v241 = vsub.f32 %v44, %v240
  %v242 = vand.u32 %v241, 4294901760
  %v243 = vsub.f32 %v241, %v242
  %v244 = vand.u32 %v243, 4294901760
  %245 = vmatpush.msra.mxu0 %v244
  %v246 = vand.u32 %v43, 4294901760
  %v247 = vsub.f32 %v43, %v246
  %v248 = vand.u32 %v247, 4294901760
  %v249 = vsub.f32 %v247, %v248
  %v250 = vand.u32 %v249, 4294901760
  %251 = vmatpush.msra.mxu0 %v250
  %v252 = vand.u32 %v42, 4294901760
  %v253 = vsub.f32 %v42, %v252
  %v254 = vand.u32 %v253, 4294901760
  %v255 = vsub.f32 %v253, %v254
  %v256 = vand.u32 %v255, 4294901760
  %257 = vmatpush.msra.mxu0 %v256
  %v258 = vand.u32 %v41, 4294901760
  %v259 = vsub.f32 %v41, %v258
  %v260 = vand.u32 %v259, 4294901760
  %v261 = vsub.f32 %v259, %v260
  %v262 = vand.u32 %v261, 4294901760
  %263 = vmatpush.msra.mxu0 %v262
  %v264 = vand.u32 %v40, 4294901760
  %v265 = vsub.f32 %v40, %v264
  %v266 = vand.u32 %v265, 4294901760
  %v267 = vsub.f32 %v265, %v266
  %v268 = vand.u32 %v267, 4294901760
  %269 = vmatpush.msra.mxu0 %v268
  %v270 = vand.u32 %v39, 4294901760
  %v271 = vsub.f32 %v39, %v270
  %v272 = vand.u32 %v271, 4294901760
  %v273 = vsub.f32 %v271, %v272
  %v274 = vand.u32 %v273, 4294901760
  %275 = vmatpush.msra.mxu0 %v274
  %v276 = vand.u32 %v38, 4294901760
  %v277 = vsub.f32 %v38, %v276
  %v278 = vand.u32 %v277, 4294901760
  %v279 = vsub.f32 %v277, %v278
  %v280 = vand.u32 %v279, 4294901760
  %281 = vmatpush.msra.mxu0 %v280
  %v282 = vand.u32 %v37, 4294901760
  %v283 = vsub.f32 %v37, %v282
  %v284 = vand.u32 %v283, 4294901760
  %v285 = vsub.f32 %v283, %v284
  %v286 = vand.u32 %v285, 4294901760
  %287 = vmatpush.msra.mxu0 %v286
  %v288 = vand.u32 %v36, 4294901760
  %v289 = vsub.f32 %v36, %v288
  %v290 = vand.u32 %v289, 4294901760
  %v291 = vsub.f32 %v289, %v290
  %v292 = vand.u32 %v291, 4294901760
  %293 = vmatpush.msra.mxu0 %v292
  %v294 = vand.u32 %v35, 4294901760
  %v295 = vsub.f32 %v35, %v294
  %v296 = vand.u32 %v295, 4294901760
  %v297 = vsub.f32 %v295, %v296
  %v298 = vand.u32 %v297, 4294901760
  %299 = vmatpush.msra.mxu0 %v298
  %v300 = vand.u32 %v34, 4294901760
  %v301 = vsub.f32 %v34, %v300
  %v302 = vand.u32 %v301, 4294901760
  %v303 = vsub.f32 %v301, %v302
  %v304 = vand.u32 %v303, 4294901760
  %305 = vmatpush.msra.mxu0 %v304
  %v306 = vand.u32 %v48, 4294901760
  %307 = vmatmul.f32.gmra.mxu0 %v306
  %v308 = vpop.f32.mrf.mxu0
  %v309 = vadd.f32 %v124, %v308
  %v310 = vand.u32 %v51, 4294901760
  %311 = vmatmul.f32.gmra.mxu0 %v310
  %v312 = vpop.f32.mrf.mxu0
  %v313 = vadd.f32 %v132, %v312
  %v314 = vand.u32 %v54, 4294901760
  %315 = vmatmul.f32.gmra.mxu0 %v314
  %v316 = vpop.f32.mrf.mxu0
  %v317 = vadd.f32 %v140, %v316
  %v318 = vand.u32 %v57, 4294901760
  %319 = vmatmul.f32.gmra.mxu0 %v318
  %v320 = vpop.f32.mrf.mxu0
  %v321 = vadd.f32 %v148, %v320
  %v322 = vand.u32 %v60, 4294901760
  %323 = vmatmul.f32.gmra.mxu0 %v322
  %v324 = vpop.f32.mrf.mxu0
  %v325 = vadd.f32 %v156, %v324
  %v326 = vand.u32 %v63, 4294901760
  %327 = vmatmul.f32.gmra.mxu0 %v326
  %v328 = vpop.f32.mrf.mxu0
  %v329 = vadd.f32 %v164, %v328
  %v330 = vand.u32 %v66, 4294901760
  %331 = vmatmul.f32.gmra.mxu0 %v330
  %v332 = vpop.f32.mrf.mxu0
  %v333 = vadd.f32 %v172, %v332
  %v334 = vand.u32 %v69, 4294901760
  %335 = vmatmul.f32.gmra.mxu0 %v334
  %v336 = vpop.f32.mrf.mxu0
  %v337 = vadd.f32 %v180, %v336
  %v338 = vand.u32 %v72, 4294901760
  %339 = vmatmul.f32.gmra.mxu0 %v338
  %v340 = vpop.f32.mrf.mxu0
  %v341 = vadd.f32 %v188, %v340
  %v342 = vand.u32 %v75, 4294901760
  %343 = vmatmul.f32.gmra.mxu0 %v342
  %v344 = vpop.f32.mrf.mxu0
  %v345 = vadd.f32 %v196, %v344
  %v346 = vand.u32 %v78, 4294901760
  %347 = vmatmul.f32.gmra.mxu0 %v346
  %v348 = vpop.f32.mrf.mxu0
  %v349 = vadd.f32 %v204, %v348
  %v350 = vand.u32 %v81, 4294901760
  %351 = vmatmul.f32.gmra.mxu0 %v350
  %v352 = vpop.f32.mrf.mxu0
  %v353 = vadd.f32 %v212, %v352
  %v354 = vand.u32 %v84, 4294901760
  %355 = vmatmul.f32.gmra.mxu0 %v354
  %v356 = vpop.f32.mrf.mxu0
  %v357 = vadd.f32 %v220, %v356
  %v358 = vand.u32 %v87, 4294901760
  %359 = vmatmul.f32.gmra.mxu0 %v358
  %v360 = vpop.f32.mrf.mxu0
  %v361 = vadd.f32 %v228, %v360
  %362 = vdwg.mxu0
  %363 = vmatpush.msra.mxu0 0.0
  %364 = vmatpush.msra.mxu0 0.0
  %365 = vmatpush.msra.mxu0 0.0
  %366 = vmatpush.msra.mxu0 0.0
  %v367 = vand.u32 %v45, 4294901760
  %v368 = vsub.f32 %v45, %v367
  %369 = vmatpush.msra.mxu0 %v368
  %v370 = vand.u32 %v44, 4294901760
  %v371 = vsub.f32 %v44, %v370
  %372 = vmatpush.msra.mxu0 %v371
  %v373 = vand.u32 %v43, 4294901760
  %v374 = vsub.f32 %v43, %v373
  %375 = vmatpush.msra.mxu0 %v374
  %v376 = vand.u32 %v42, 4294901760
  %v377 = vsub.f32 %v42, %v376
  %378 = vmatpush.msra.mxu0 %v377
  %v379 = vand.u32 %v41, 4294901760
  %v380 = vsub.f32 %v41, %v379
  %381 = vmatpush.msra.mxu0 %v380
  %v382 = vand.u32 %v40, 4294901760
  %v383 = vsub.f32 %v40, %v382
  %384 = vmatpush.msra.mxu0 %v383
  %v385 = vand.u32 %v39, 4294901760
  %v386 = vsub.f32 %v39, %v385
  %387 = vmatpush.msra.mxu0 %v386
  %v388 = vand.u32 %v38, 4294901760
  %v389 = vsub.f32 %v38, %v388
  %390 = vmatpush.msra.mxu0 %v389
  %v391 = vand.u32 %v37, 4294901760
  %v392 = vsub.f32 %v37, %v391
  %393 = vmatpush.msra.mxu0 %v392
  %v394 = vand.u32 %v36, 4294901760
  %v395 = vsub.f32 %v36, %v394
  %396 = vmatpush.msra.mxu0 %v395
  %v397 = vand.u32 %v35, 4294901760
  %v398 = vsub.f32 %v35, %v397
  %399 = vmatpush.msra.mxu0 %v398
  %v400 = vand.u32 %v34, 4294901760
  %v401 = vsub.f32 %v34, %v400
  %402 = vmatpush.msra.mxu0 %v401
  %v403 = vand.u32 %v48, 4294901760
  %v404 = vsub.f32 %v48, %v403
  %405 = vmatmul.f32.gmra.mxu0 %v404
  %v406 = vpop.f32.mrf.mxu0
  %v407 = vadd.f32 %v309, %v406
  %v408 = vand.u32 %v51, 4294901760
  %v409 = vsub.f32 %v51, %v408
  %410 = vmatmul.f32.gmra.mxu0 %v409
  %v411 = vpop.f32.mrf.mxu0
  %v412 = vadd.f32 %v313, %v411
  %v413 = vand.u32 %v54, 4294901760
  %v414 = vsub.f32 %v54, %v413
  %415 = vmatmul.f32.gmra.mxu0 %v414
  %v416 = vpop.f32.mrf.mxu0
  %v417 = vadd.f32 %v317, %v416
  %v418 = vand.u32 %v57, 4294901760
  %v419 = vsub.f32 %v57, %v418
  %420 = vmatmul.f32.gmra.mxu0 %v419
  %v421 = vpop.f32.mrf.mxu0
  %v422 = vadd.f32 %v321, %v421
  %v423 = vand.u32 %v60, 4294901760
  %v424 = vsub.f32 %v60, %v423
  %425 = vmatmul.f32.gmra.mxu0 %v424
  %v426 = vpop.f32.mrf.mxu0
  %v427 = vadd.f32 %v325, %v426
  %v428 = vand.u32 %v63, 4294901760
  %v429 = vsub.f32 %v63, %v428
  %430 = vmatmul.f32.gmra.mxu0 %v429
  %v431 = vpop.f32.mrf.mxu0
  %v432 = vadd.f32 %v329, %v431
  %v433 = vand.u32 %v66, 4294901760
  %v434 = vsub.f32 %v66, %v433
  %435 = vmatmul.f32.gmra.mxu0 %v434
  %v436 = vpop.f32.mrf.mxu0
  %v437 = vadd.f32 %v333, %v436
  %v438 = vand.u32 %v69, 4294901760
  %v439 = vsub.f32 %v69, %v438
  %440 = vmatmul.f32.gmra.mxu0 %v439
  %v441 = vpop.f32.mrf.mxu0
  %v442 = vadd.f32 %v337, %v441
  %v443 = vand.u32 %v72, 4294901760
  %v444 = vsub.f32 %v72, %v443
  %445 = vmatmul.f32.gmra.mxu0 %v444
  %v446 = vpop.f32.mrf.mxu0
  %v447 = vadd.f32 %v341, %v446
  %v448 = vand.u32 %v75, 4294901760
  %v449 = vsub.f32 %v75, %v448
  %450 = vmatmul.f32.gmra.mxu0 %v449
  %v451 = vpop.f32.mrf.mxu0
  %v452 = vadd.f32 %v345, %v451
  %v453 = vand.u32 %v78, 4294901760
  %v454 = vsub.f32 %v78, %v453
  %455 = vmatmul.f32.gmra.mxu0 %v454
  %v456 = vpop.f32.mrf.mxu0
  %v457 = vadd.f32 %v349, %v456
  %v458 = vand.u32 %v81, 4294901760
  %v459 = vsub.f32 %v81, %v458
  %460 = vmatmul.f32.gmra.mxu0 %v459
  %v461 = vpop.f32.mrf.mxu0
  %v462 = vadd.f32 %v353, %v461
  %v463 = vand.u32 %v84, 4294901760
  %v464 = vsub.f32 %v84, %v463
  %465 = vmatmul.f32.gmra.mxu0 %v464
  %v466 = vpop.f32.mrf.mxu0
  %v467 = vadd.f32 %v357, %v466
  %v468 = vand.u32 %v87, 4294901760
  %v469 = vsub.f32 %v87, %v468
  %470 = vmatmul.f32.gmra.mxu0 %v469
  %v471 = vpop.f32.mrf.mxu0
  %v472 = vadd.f32 %v361, %v471
  %473 = vdwg.mxu0
  %474 = vmatpush.msra.mxu0 0.0
  %475 = vmatpush.msra.mxu0 0.0
  %476 = vmatpush.msra.mxu0 0.0
  %477 = vmatpush.msra.mxu0 0.0
  %v478 = vand.u32 %v45, 4294901760
  %479 = vmatpush.msra.mxu0 %v478
  %v480 = vand.u32 %v44, 4294901760
  %481 = vmatpush.msra.mxu0 %v480
  %v482 = vand.u32 %v43, 4294901760
  %483 = vmatpush.msra.mxu0 %v482
  %v484 = vand.u32 %v42, 4294901760
  %485 = vmatpush.msra.mxu0 %v484
  %v486 = vand.u32 %v41, 4294901760
  %487 = vmatpush.msra.mxu0 %v486
  %v488 = vand.u32 %v40, 4294901760
  %489 = vmatpush.msra.mxu0 %v488
  %v490 = vand.u32 %v39, 4294901760
  %491 = vmatpush.msra.mxu0 %v490
  %v492 = vand.u32 %v38, 4294901760
  %493 = vmatpush.msra.mxu0 %v492
  %v494 = vand.u32 %v37, 4294901760
  %495 = vmatpush.msra.mxu0 %v494
  %v496 = vand.u32 %v36, 4294901760
  %497 = vmatpush.msra.mxu0 %v496
  %v498 = vand.u32 %v35, 4294901760
  %499 = vmatpush.msra.mxu0 %v498
  %v500 = vand.u32 %v34, 4294901760
  %501 = vmatpush.msra.mxu0 %v500
  %v502 = vand.u32 %v48, 4294901760
  %v503 = vsub.f32 %v48, %v502
  %v504 = vand.u32 %v503, 4294901760
  %505 = vmatmul.f32.gmra.mxu0 %v504
  %v506 = vpop.f32.mrf.mxu0
  %v507 = vadd.f32 %v407, %v506
  %v508 = vand.u32 %v51, 4294901760
  %v509 = vsub.f32 %v51, %v508
  %v510 = vand.u32 %v509, 4294901760
  %511 = vmatmul.f32.gmra.mxu0 %v510
  %v512 = vpop.f32.mrf.mxu0
  %v513 = vadd.f32 %v412, %v512
  %v514 = vand.u32 %v54, 4294901760
  %v515 = vsub.f32 %v54, %v514
  %v516 = vand.u32 %v515, 4294901760
  %517 = vmatmul.f32.gmra.mxu0 %v516
  %v518 = vpop.f32.mrf.mxu0
  %v519 = vadd.f32 %v417, %v518
  %v520 = vand.u32 %v57, 4294901760
  %v521 = vsub.f32 %v57, %v520
  %v522 = vand.u32 %v521, 4294901760
  %523 = vmatmul.f32.gmra.mxu0 %v522
  %v524 = vpop.f32.mrf.mxu0
  %v525 = vadd.f32 %v422, %v524
  %v526 = vand.u32 %v60, 4294901760
  %v527 = vsub.f32 %v60, %v526
  %v528 = vand.u32 %v527, 4294901760
  %529 = vmatmul.f32.gmra.mxu0 %v528
  %v530 = vpop.f32.mrf.mxu0
  %v531 = vadd.f32 %v427, %v530
  %v532 = vand.u32 %v63, 4294901760
  %v533 = vsub.f32 %v63, %v532
  %v534 = vand.u32 %v533, 4294901760
  %535 = vmatmul.f32.gmra.mxu0 %v534
  %v536 = vpop.f32.mrf.mxu0
  %v537 = vadd.f32 %v432, %v536
  %v538 = vand.u32 %v66, 4294901760
  %v539 = vsub.f32 %v66, %v538
  %v540 = vand.u32 %v539, 4294901760
  %541 = vmatmul.f32.gmra.mxu0 %v540
  %v542 = vpop.f32.mrf.mxu0
  %v543 = vadd.f32 %v437, %v542
  %v544 = vand.u32 %v69, 4294901760
  %v545 = vsub.f32 %v69, %v544
  %v546 = vand.u32 %v545, 4294901760
  %547 = vmatmul.f32.gmra.mxu0 %v546
  %v548 = vpop.f32.mrf.mxu0
  %v549 = vadd.f32 %v442, %v548
  %v550 = vand.u32 %v72, 4294901760
  %v551 = vsub.f32 %v72, %v550
  %v552 = vand.u32 %v551, 4294901760
  %553 = vmatmul.f32.gmra.mxu0 %v552
  %v554 = vpop.f32.mrf.mxu0
  %v555 = vadd.f32 %v447, %v554
  %v556 = vand.u32 %v75, 4294901760
  %v557 = vsub.f32 %v75, %v556
  %v558 = vand.u32 %v557, 4294901760
  %559 = vmatmul.f32.gmra.mxu0 %v558
  %v560 = vpop.f32.mrf.mxu0
  %v561 = vadd.f32 %v452, %v560
  %v562 = vand.u32 %v78, 4294901760
  %v563 = vsub.f32 %v78, %v562
  %v564 = vand.u32 %v563, 4294901760
  %565 = vmatmul.f32.gmra.mxu0 %v564
  %v566 = vpop.f32.mrf.mxu0
  %v567 = vadd.f32 %v457, %v566
  %v568 = vand.u32 %v81, 4294901760
  %v569 = vsub.f32 %v81, %v568
  %v570 = vand.u32 %v569, 4294901760
  %571 = vmatmul.f32.gmra.mxu0 %v570
  %v572 = vpop.f32.mrf.mxu0
  %v573 = vadd.f32 %v462, %v572
  %v574 = vand.u32 %v84, 4294901760
  %v575 = vsub.f32 %v84, %v574
  %v576 = vand.u32 %v575, 4294901760
  %577 = vmatmul.f32.gmra.mxu0 %v576
  %v578 = vpop.f32.mrf.mxu0
  %v579 = vadd.f32 %v467, %v578
  %v580 = vand.u32 %v87, 4294901760
  %v581 = vsub.f32 %v87, %v580
  %v582 = vand.u32 %v581, 4294901760
  %583 = vmatmul.f32.gmra.mxu0 %v582
  %v584 = vpop.f32.mrf.mxu0
  %v585 = vadd.f32 %v472, %v584
  %586 = vdwg.mxu0
  %587 = vmatpush.msra.mxu0 0.0
  %588 = vmatpush.msra.mxu0 0.0
  %589 = vmatpush.msra.mxu0 0.0
  %590 = vmatpush.msra.mxu0 0.0
  %v591 = vand.u32 %v45, 4294901760
  %v592 = vsub.f32 %v45, %v591
  %v593 = vand.u32 %v592, 4294901760
  %594 = vmatpush.msra.mxu0 %v593
  %v595 = vand.u32 %v44, 4294901760
  %v596 = vsub.f32 %v44, %v595
  %v597 = vand.u32 %v596, 4294901760
  %598 = vmatpush.msra.mxu0 %v597
  %v599 = vand.u32 %v43, 4294901760
  %v600 = vsub.f32 %v43, %v599
  %v601 = vand.u32 %v600, 4294901760
  %602 = vmatpush.msra.mxu0 %v601
  %v603 = vand.u32 %v42, 4294901760
  %v604 = vsub.f32 %v42, %v603
  %v605 = vand.u32 %v604, 4294901760
  %606 = vmatpush.msra.mxu0 %v605
  %v607 = vand.u32 %v41, 4294901760
  %v608 = vsub.f32 %v41, %v607
  %v609 = vand.u32 %v608, 4294901760
  %610 = vmatpush.msra.mxu0 %v609
  %v611 = vand.u32 %v40, 4294901760
  %v612 = vsub.f32 %v40, %v611
  %v613 = vand.u32 %v612, 4294901760
  %614 = vmatpush.msra.mxu0 %v613
  %v615 = vand.u32 %v39, 4294901760
  %v616 = vsub.f32 %v39, %v615
  %v617 = vand.u32 %v616, 4294901760
  %618 = vmatpush.msra.mxu0 %v617
  %v619 = vand.u32 %v38, 4294901760
  %v620 = vsub.f32 %v38, %v619
  %v621 = vand.u32 %v620, 4294901760
  %622 = vmatpush.msra.mxu0 %v621
  %v623 = vand.u32 %v37, 4294901760
  %v624 = vsub.f32 %v37, %v623
  %v625 = vand.u32 %v624, 4294901760
  %626 = vmatpush.msra.mxu0 %v625
  %v627 = vand.u32 %v36, 4294901760
  %v628 = vsub.f32 %v36, %v627
  %v629 = vand.u32 %v628, 4294901760
  %630 = vmatpush.msra.mxu0 %v629
  %v631 = vand.u32 %v35, 4294901760
  %v632 = vsub.f32 %v35, %v631
  %v633 = vand.u32 %v632, 4294901760
  %634 = vmatpush.msra.mxu0 %v633
  %v635 = vand.u32 %v34, 4294901760
  %v636 = vsub.f32 %v34, %v635
  %v637 = vand.u32 %v636, 4294901760
  %638 = vmatpush.msra.mxu0 %v637
  %v639 = vand.u32 %v48, 4294901760
  %640 = vmatmul.f32.gmra.mxu0 %v639
  %v641 = vpop.f32.mrf.mxu0
  %v642 = vadd.f32 %v507, %v641
  %v643 = vand.u32 %v51, 4294901760
  %644 = vmatmul.f32.gmra.mxu0 %v643
  %v645 = vpop.f32.mrf.mxu0
  %v646 = vadd.f32 %v513, %v645
  %v647 = vand.u32 %v54, 4294901760
  %648 = vmatmul.f32.gmra.mxu0 %v647
  %v649 = vpop.f32.mrf.mxu0
  %v650 = vadd.f32 %v519, %v649
  %v651 = vand.u32 %v57, 4294901760
  %652 = vmatmul.f32.gmra.mxu0 %v651
  %v653 = vpop.f32.mrf.mxu0
  %v654 = vadd.f32 %v525, %v653
  %v655 = vand.u32 %v60, 4294901760
  %656 = vmatmul.f32.gmra.mxu0 %v655
  %v657 = vpop.f32.mrf.mxu0
  %v658 = vadd.f32 %v531, %v657
  %v659 = vand.u32 %v63, 4294901760
  %660 = vmatmul.f32.gmra.mxu0 %v659
  %v661 = vpop.f32.mrf.mxu0
  %v662 = vadd.f32 %v537, %v661
  %v663 = vand.u32 %v66, 4294901760
  %664 = vmatmul.f32.gmra.mxu0 %v663
  %v665 = vpop.f32.mrf.mxu0
  %v666 = vadd.f32 %v543, %v665
  %v667 = vand.u32 %v69, 4294901760
  %668 = vmatmul.f32.gmra.mxu0 %v667
  %v669 = vpop.f32.mrf.mxu0
  %v670 = vadd.f32 %v549, %v669
  %v671 = vand.u32 %v72, 4294901760
  %672 = vmatmul.f32.gmra.mxu0 %v671
  %v673 = vpop.f32.mrf.mxu0
  %v674 = vadd.f32 %v555, %v673
  %v675 = vand.u32 %v75, 4294901760
  %676 = vmatmul.f32.gmra.mxu0 %v675
  %v677 = vpop.f32.mrf.mxu0
  %v678 = vadd.f32 %v561, %v677
  %v679 = vand.u32 %v78, 4294901760
  %680 = vmatmul.f32.gmra.mxu0 %v679
  %v681 = vpop.f32.mrf.mxu0
  %v682 = vadd.f32 %v567, %v681
  %v683 = vand.u32 %v81, 4294901760
  %684 = vmatmul.f32.gmra.mxu0 %v683
  %v685 = vpop.f32.mrf.mxu0
  %v686 = vadd.f32 %v573, %v685
  %v687 = vand.u32 %v84, 4294901760
  %688 = vmatmul.f32.gmra.mxu0 %v687
  %v689 = vpop.f32.mrf.mxu0
  %v690 = vadd.f32 %v579, %v689
  %v691 = vand.u32 %v87, 4294901760
  %692 = vmatmul.f32.gmra.mxu0 %v691
  %v693 = vpop.f32.mrf.mxu0
  %v694 = vadd.f32 %v585, %v693
  %695 = vdwg.mxu0
  %696 = vmatpush.msra.mxu0 0.0
  %697 = vmatpush.msra.mxu0 0.0
  %698 = vmatpush.msra.mxu0 0.0
  %699 = vmatpush.msra.mxu0 0.0
  %v700 = vand.u32 %v45, 4294901760
  %701 = vmatpush.msra.mxu0 %v700
  %v702 = vand.u32 %v44, 4294901760
  %703 = vmatpush.msra.mxu0 %v702
  %v704 = vand.u32 %v43, 4294901760
  %705 = vmatpush.msra.mxu0 %v704
  %v706 = vand.u32 %v42, 4294901760
  %707 = vmatpush.msra.mxu0 %v706
  %v708 = vand.u32 %v41, 4294901760
  %709 = vmatpush.msra.mxu0 %v708
  %v710 = vand.u32 %v40, 4294901760
  %711 = vmatpush.msra.mxu0 %v710
  %v712 = vand.u32 %v39, 4294901760
  %713 = vmatpush.msra.mxu0 %v712
  %v714 = vand.u32 %v38, 4294901760
  %715 = vmatpush.msra.mxu0 %v714
  %v716 = vand.u32 %v37, 4294901760
  %717 = vmatpush.msra.mxu0 %v716
  %v718 = vand.u32 %v36, 4294901760
  %719 = vmatpush.msra.mxu0 %v718
  %v720 = vand.u32 %v35, 4294901760
  %721 = vmatpush.msra.mxu0 %v720
  %v722 = vand.u32 %v34, 4294901760
  %723 = vmatpush.msra.mxu0 %v722
  %v724 = vand.u32 %v48, 4294901760
  %725 = vmatmul.f32.gmra.mxu0 %v724
  %v726 = vpop.f32.mrf.mxu0
  %v727 = vadd.f32 %v642, %v726
  %v728 = vand.u32 %v51, 4294901760
  %729 = vmatmul.f32.gmra.mxu0 %v728
  %v730 = vpop.f32.mrf.mxu0
  %v731 = vadd.f32 %v646, %v730
  %v732 = vand.u32 %v54, 4294901760
  %733 = vmatmul.f32.gmra.mxu0 %v732
  %v734 = vpop.f32.mrf.mxu0
  %v735 = vadd.f32 %v650, %v734
  %v736 = vand.u32 %v57, 4294901760
  %737 = vmatmul.f32.gmra.mxu0 %v736
  %v738 = vpop.f32.mrf.mxu0
  %v739 = vadd.f32 %v654, %v738
  %v740 = vand.u32 %v60, 4294901760
  %741 = vmatmul.f32.gmra.mxu0 %v740
  %v742 = vpop.f32.mrf.mxu0
  %v743 = vadd.f32 %v658, %v742
  %v744 = vand.u32 %v63, 4294901760
  %745 = vmatmul.f32.gmra.mxu0 %v744
  %v746 = vpop.f32.mrf.mxu0
  %v747 = vadd.f32 %v662, %v746
  %v748 = vand.u32 %v66, 4294901760
  %749 = vmatmul.f32.gmra.mxu0 %v748
  %v750 = vpop.f32.mrf.mxu0
  %v751 = vadd.f32 %v666, %v750
  %v752 = vand.u32 %v69, 4294901760
  %753 = vmatmul.f32.gmra.mxu0 %v752
  %v754 = vpop.f32.mrf.mxu0
  %v755 = vadd.f32 %v670, %v754
  %v756 = vand.u32 %v72, 4294901760
  %757 = vmatmul.f32.gmra.mxu0 %v756
  %v758 = vpop.f32.mrf.mxu0
  %v759 = vadd.f32 %v674, %v758
  %v760 = vand.u32 %v75, 4294901760
  %761 = vmatmul.f32.gmra.mxu0 %v760
  %v762 = vpop.f32.mrf.mxu0
  %v763 = vadd.f32 %v678, %v762
  %v764 = vand.u32 %v78, 4294901760
  %765 = vmatmul.f32.gmra.mxu0 %v764
  %v766 = vpop.f32.mrf.mxu0
  %v767 = vadd.f32 %v682, %v766
  %v768 = vand.u32 %v81, 4294901760
  %769 = vmatmul.f32.gmra.mxu0 %v768
  %v770 = vpop.f32.mrf.mxu0
  %v771 = vadd.f32 %v686, %v770
  %v772 = vand.u32 %v84, 4294901760
  %773 = vmatmul.f32.gmra.mxu0 %v772
  %v774 = vpop.f32.mrf.mxu0
  %v775 = vadd.f32 %v690, %v774
  %v776 = vand.u32 %v87, 4294901760
  %777 = vmatmul.f32.gmra.mxu0 %v776
  %v778 = vpop.f32.mrf.mxu0
  %v779 = vadd.f32 %v694, %v778
  %780 = vdwg.mxu0
  %v781 = vld [vmem:[%s1] sm:$0xff]
  %v782 = vld [vmem:[%s1 + $0x8] sm:$0xff]
  %v783 = vld [vmem:[%s2] sm:$0xff]
  %v784 = vld [vmem:[%s2 + $0x8] sm:$0xff]
  %v785 = vld [vmem:[%s2 + $0x10] sm:$0xff]
  %v786 = vld [vmem:[%s2 + $0x18] sm:$0xff]
  %v787 = vld [vmem:[%s2 + $0x20] sm:$0xff]
  %v788 = vld [vmem:[%s2 + $0x28] sm:$0xff]
  %v789 = vld [vmem:[%s2 + $0x30] sm:$0xff]
  %v790 = vld [vmem:[%s2 + $0x38] sm:$0xff]
  %v791 = vld [vmem:[%s2 + $0x40] sm:$0xff]
  %v792 = vld [vmem:[%s2 + $0x48] sm:$0xff]
  %v793 = vld [vmem:[%s2 + $0x50] sm:$0xff]
  %v794 = vld [vmem:[%s2 + $0x58] sm:$0xff]
  %v795 = vld [vmem:[%s2 + $0x60] sm:$0xff]
  %v796 = vld [vmem:[%s2 + $0x68] sm:$0xf]
  %v797 = vld [vmem:[%s3] sm:$0x1]
  %799 = vset.pattern.permute.xlu0 0
  %800 = vperm.xlu0 %799, %v783
  %v801 = vpop.permute.xlu0 %800
  %804 = vset.pattern.permute.xlu0 0
  %805 = vperm.xlu0 %804, %v784
  %v806 = vpop.permute.xlu0 %805
  %809 = vset.pattern.permute.xlu0 0
  %810 = vperm.xlu0 %809, %v785
  %v811 = vpop.permute.xlu0 %810
  %814 = vset.pattern.permute.xlu0 0
  %815 = vperm.xlu0 %814, %v786
  %v816 = vpop.permute.xlu0 %815
  %819 = vset.pattern.permute.xlu0 0
  %820 = vperm.xlu0 %819, %v787
  %v821 = vpop.permute.xlu0 %820
  %824 = vset.pattern.permute.xlu0 0
  %825 = vperm.xlu0 %824, %v788
  %v826 = vpop.permute.xlu0 %825
  %829 = vset.pattern.permute.xlu0 0
  %830 = vperm.xlu0 %829, %v789
  %v831 = vpop.permute.xlu0 %830
  %834 = vset.pattern.permute.xlu0 0
  %835 = vperm.xlu0 %834, %v790
  %v836 = vpop.permute.xlu0 %835
  %839 = vset.pattern.permute.xlu0 0
  %840 = vperm.xlu0 %839, %v791
  %v841 = vpop.permute.xlu0 %840
  %844 = vset.pattern.permute.xlu0 0
  %845 = vperm.xlu0 %844, %v792
  %v846 = vpop.permute.xlu0 %845
  %849 = vset.pattern.permute.xlu0 0
  %850 = vperm.xlu0 %849, %v793
  %v851 = vpop.permute.xlu0 %850
  %854 = vset.pattern.permute.xlu0 0
  %855 = vperm.xlu0 %854, %v794
  %v856 = vpop.permute.xlu0 %855
  %859 = vset.pattern.permute.xlu0 0
  %860 = vperm.xlu0 %859, %v795
  %v861 = vpop.permute.xlu0 %860
  %864 = vset.pattern.permute.xlu0 0
  %865 = vperm.xlu0 %864, %v796
  %v866 = vpop.permute.xlu0 %865
  %v869 = vperm.slane %v797, 0
  %v871 = vmul.f32 %v801, %v869
  %v872 = vmul.f32 %v806, %v869
  %v873 = vmul.f32 %v811, %v869
  %v874 = vmul.f32 %v816, %v869
  %v875 = vmul.f32 %v821, %v869
  %v876 = vmul.f32 %v826, %v869
  %v877 = vmul.f32 %v831, %v869
  %v878 = vmul.f32 %v836, %v869
  %v879 = vmul.f32 %v841, %v869
  %v880 = vmul.f32 %v846, %v869
  %v881 = vmul.f32 %v851, %v869
  %v882 = vmul.f32 %v856, %v869
  %v883 = vmul.f32 %v861, %v869
  %v884 = vmul.f32 %v866, %v869
  %vm885 = vcmask 130048
  %v887 = vsel %vm885, %v727, 0
  %v890 = vsel %vm885, %v731, 0
  %v893 = vsel %vm885, %v735, 0
  %v896 = vsel %vm885, %v739, 0
  %v899 = vsel %vm885, %v743, 0
  %v902 = vsel %vm885, %v747, 0
  %v905 = vsel %vm885, %v751, 0
  %v908 = vsel %vm885, %v755, 0
  %v911 = vsel %vm885, %v759, 0
  %v914 = vsel %vm885, %v763, 0
  %v917 = vsel %vm885, %v767, 0
  %v920 = vsel %vm885, %v771, 0
  %v923 = vsel %vm885, %v775, 0
  %v926 = vsel %vm885, %v779, 0
  %928 = vmatpush.msra.mxu0 0.0
  %929 = vmatpush.msra.mxu0 0.0
  %930 = vmatpush.msra.mxu0 0.0
  %931 = vmatpush.msra.mxu0 0.0
  %932 = vmatpush.msra.mxu0 0.0
  %933 = vmatpush.msra.mxu0 0.0
  %934 = vmatpush.msra.mxu0 0.0
  %935 = vmatpush.msra.mxu0 0.0
  %936 = vmatpush.msra.mxu0 0.0
  %937 = vmatpush.msra.mxu0 0.0
  %938 = vmatpush.msra.mxu0 0.0
  %939 = vmatpush.msra.mxu0 0.0
  %940 = vmatpush.msra.mxu0 0.0
  %941 = vmatpush.msra.mxu0 0.0
  %v942 = vand.u32 %v782, 4294901760
  %943 = vmatpush.msra.mxu0 %v942
  %v944 = vand.u32 %v781, 4294901760
  %945 = vmatpush.msra.mxu0 %v944
  %v946 = vand.u32 %v887, 4294901760
  %v947 = vsub.f32 %v887, %v946
  %v948 = vand.u32 %v947, 4294901760
  %v949 = vsub.f32 %v947, %v948
  %v950 = vand.u32 %v949, 4294901760
  %951 = vmatmul.f32.gmra.mxu0 %v950
  %v952 = vpop.f32.mrf.mxu0
  %v953 = vadd.f32 %v871, %v952
  %v954 = vand.u32 %v890, 4294901760
  %v955 = vsub.f32 %v890, %v954
  %v956 = vand.u32 %v955, 4294901760
  %v957 = vsub.f32 %v955, %v956
  %v958 = vand.u32 %v957, 4294901760
  %959 = vmatmul.f32.gmra.mxu0 %v958
  %v960 = vpop.f32.mrf.mxu0
  %v961 = vadd.f32 %v872, %v960
  %v962 = vand.u32 %v893, 4294901760
  %v963 = vsub.f32 %v893, %v962
  %v964 = vand.u32 %v963, 4294901760
  %v965 = vsub.f32 %v963, %v964
  %v966 = vand.u32 %v965, 4294901760
  %967 = vmatmul.f32.gmra.mxu0 %v966
  %v968 = vpop.f32.mrf.mxu0
  %v969 = vadd.f32 %v873, %v968
  %v970 = vand.u32 %v896, 4294901760
  %v971 = vsub.f32 %v896, %v970
  %v972 = vand.u32 %v971, 4294901760
  %v973 = vsub.f32 %v971, %v972
  %v974 = vand.u32 %v973, 4294901760
  %975 = vmatmul.f32.gmra.mxu0 %v974
  %v976 = vpop.f32.mrf.mxu0
  %v977 = vadd.f32 %v874, %v976
  %v978 = vand.u32 %v899, 4294901760
  %v979 = vsub.f32 %v899, %v978
  %v980 = vand.u32 %v979, 4294901760
  %v981 = vsub.f32 %v979, %v980
  %v982 = vand.u32 %v981, 4294901760
  %983 = vmatmul.f32.gmra.mxu0 %v982
  %v984 = vpop.f32.mrf.mxu0
  %v985 = vadd.f32 %v875, %v984
  %v986 = vand.u32 %v902, 4294901760
  %v987 = vsub.f32 %v902, %v986
  %v988 = vand.u32 %v987, 4294901760
  %v989 = vsub.f32 %v987, %v988
  %v990 = vand.u32 %v989, 4294901760
  %991 = vmatmul.f32.gmra.mxu0 %v990
  %v992 = vpop.f32.mrf.mxu0
  %v993 = vadd.f32 %v876, %v992
  %v994 = vand.u32 %v905, 4294901760
  %v995 = vsub.f32 %v905, %v994
  %v996 = vand.u32 %v995, 4294901760
  %v997 = vsub.f32 %v995, %v996
  %v998 = vand.u32 %v997, 4294901760
  %999 = vmatmul.f32.gmra.mxu0 %v998
  %v1000 = vpop.f32.mrf.mxu0
  %v1001 = vadd.f32 %v877, %v1000
  %v1002 = vand.u32 %v908, 4294901760
  %v1003 = vsub.f32 %v908, %v1002
  %v1004 = vand.u32 %v1003, 4294901760
  %v1005 = vsub.f32 %v1003, %v1004
  %v1006 = vand.u32 %v1005, 4294901760
  %1007 = vmatmul.f32.gmra.mxu0 %v1006
  %v1008 = vpop.f32.mrf.mxu0
  %v1009 = vadd.f32 %v878, %v1008
  %v1010 = vand.u32 %v911, 4294901760
  %v1011 = vsub.f32 %v911, %v1010
  %v1012 = vand.u32 %v1011, 4294901760
  %v1013 = vsub.f32 %v1011, %v1012
  %v1014 = vand.u32 %v1013, 4294901760
  %1015 = vmatmul.f32.gmra.mxu0 %v1014
  %v1016 = vpop.f32.mrf.mxu0
  %v1017 = vadd.f32 %v879, %v1016
  %v1018 = vand.u32 %v914, 4294901760
  %v1019 = vsub.f32 %v914, %v1018
  %v1020 = vand.u32 %v1019, 4294901760
  %v1021 = vsub.f32 %v1019, %v1020
  %v1022 = vand.u32 %v1021, 4294901760
  %1023 = vmatmul.f32.gmra.mxu0 %v1022
  %v1024 = vpop.f32.mrf.mxu0
  %v1025 = vadd.f32 %v880, %v1024
  %v1026 = vand.u32 %v917, 4294901760
  %v1027 = vsub.f32 %v917, %v1026
  %v1028 = vand.u32 %v1027, 4294901760
  %v1029 = vsub.f32 %v1027, %v1028
  %v1030 = vand.u32 %v1029, 4294901760
  %1031 = vmatmul.f32.gmra.mxu0 %v1030
  %v1032 = vpop.f32.mrf.mxu0
  %v1033 = vadd.f32 %v881, %v1032
  %v1034 = vand.u32 %v920, 4294901760
  %v1035 = vsub.f32 %v920, %v1034
  %v1036 = vand.u32 %v1035, 4294901760
  %v1037 = vsub.f32 %v1035, %v1036
  %v1038 = vand.u32 %v1037, 4294901760
  %1039 = vmatmul.f32.gmra.mxu0 %v1038
  %v1040 = vpop.f32.mrf.mxu0
  %v1041 = vadd.f32 %v882, %v1040
  %v1042 = vand.u32 %v923, 4294901760
  %v1043 = vsub.f32 %v923, %v1042
  %v1044 = vand.u32 %v1043, 4294901760
  %v1045 = vsub.f32 %v1043, %v1044
  %v1046 = vand.u32 %v1045, 4294901760
  %1047 = vmatmul.f32.gmra.mxu0 %v1046
  %v1048 = vpop.f32.mrf.mxu0
  %v1049 = vadd.f32 %v883, %v1048
  %v1050 = vand.u32 %v926, 4294901760
  %v1051 = vsub.f32 %v926, %v1050
  %v1052 = vand.u32 %v1051, 4294901760
  %v1053 = vsub.f32 %v1051, %v1052
  %v1054 = vand.u32 %v1053, 4294901760
  %1055 = vmatmul.f32.gmra.mxu0 %v1054
  %v1056 = vpop.f32.mrf.mxu0
  %v1057 = vadd.f32 %v884, %v1056
  %1058 = vdwg.mxu0
  %1059 = vmatpush.msra.mxu0 0.0
  %1060 = vmatpush.msra.mxu0 0.0
  %1061 = vmatpush.msra.mxu0 0.0
  %1062 = vmatpush.msra.mxu0 0.0
  %1063 = vmatpush.msra.mxu0 0.0
  %1064 = vmatpush.msra.mxu0 0.0
  %1065 = vmatpush.msra.mxu0 0.0
  %1066 = vmatpush.msra.mxu0 0.0
  %1067 = vmatpush.msra.mxu0 0.0
  %1068 = vmatpush.msra.mxu0 0.0
  %1069 = vmatpush.msra.mxu0 0.0
  %1070 = vmatpush.msra.mxu0 0.0
  %1071 = vmatpush.msra.mxu0 0.0
  %1072 = vmatpush.msra.mxu0 0.0
  %v1073 = vand.u32 %v782, 4294901760
  %v1074 = vsub.f32 %v782, %v1073
  %v1075 = vand.u32 %v1074, 4294901760
  %v1076 = vsub.f32 %v1074, %v1075
  %v1077 = vand.u32 %v1076, 4294901760
  %1078 = vmatpush.msra.mxu0 %v1077
  %v1079 = vand.u32 %v781, 4294901760
  %v1080 = vsub.f32 %v781, %v1079
  %v1081 = vand.u32 %v1080, 4294901760
  %v1082 = vsub.f32 %v1080, %v1081
  %v1083 = vand.u32 %v1082, 4294901760
  %1084 = vmatpush.msra.mxu0 %v1083
  %v1085 = vand.u32 %v887, 4294901760
  %1086 = vmatmul.f32.gmra.mxu0 %v1085
  %v1087 = vpop.f32.mrf.mxu0
  %v1088 = vadd.f32 %v953, %v1087
  %v1089 = vand.u32 %v890, 4294901760
  %1090 = vmatmul.f32.gmra.mxu0 %v1089
  %v1091 = vpop.f32.mrf.mxu0
  %v1092 = vadd.f32 %v961, %v1091
  %v1093 = vand.u32 %v893, 4294901760
  %1094 = vmatmul.f32.gmra.mxu0 %v1093
  %v1095 = vpop.f32.mrf.mxu0
  %v1096 = vadd.f32 %v969, %v1095
  %v1097 = vand.u32 %v896, 4294901760
  %1098 = vmatmul.f32.gmra.mxu0 %v1097
  %v1099 = vpop.f32.mrf.mxu0
  %v1100 = vadd.f32 %v977, %v1099
  %v1101 = vand.u32 %v899, 4294901760
  %1102 = vmatmul.f32.gmra.mxu0 %v1101
  %v1103 = vpop.f32.mrf.mxu0
  %v1104 = vadd.f32 %v985, %v1103
  %v1105 = vand.u32 %v902, 4294901760
  %1106 = vmatmul.f32.gmra.mxu0 %v1105
  %v1107 = vpop.f32.mrf.mxu0
  %v1108 = vadd.f32 %v993, %v1107
  %v1109 = vand.u32 %v905, 4294901760
  %1110 = vmatmul.f32.gmra.mxu0 %v1109
  %v1111 = vpop.f32.mrf.mxu0
  %v1112 = vadd.f32 %v1001, %v1111
  %v1113 = vand.u32 %v908, 4294901760
  %1114 = vmatmul.f32.gmra.mxu0 %v1113
  %v1115 = vpop.f32.mrf.mxu0
  %v1116 = vadd.f32 %v1009, %v1115
  %v1117 = vand.u32 %v911, 4294901760
  %1118 = vmatmul.f32.gmra.mxu0 %v1117
  %v1119 = vpop.f32.mrf.mxu0
  %v1120 = vadd.f32 %v1017, %v1119
  %v1121 = vand.u32 %v914, 4294901760
  %1122 = vmatmul.f32.gmra.mxu0 %v1121
  %v1123 = vpop.f32.mrf.mxu0
  %v1124 = vadd.f32 %v1025, %v1123
  %v1125 = vand.u32 %v917, 4294901760
  %1126 = vmatmul.f32.gmra.mxu0 %v1125
  %v1127 = vpop.f32.mrf.mxu0
  %v1128 = vadd.f32 %v1033, %v1127
  %v1129 = vand.u32 %v920, 4294901760
  %1130 = vmatmul.f32.gmra.mxu0 %v1129
  %v1131 = vpop.f32.mrf.mxu0
  %v1132 = vadd.f32 %v1041, %v1131
  %v1133 = vand.u32 %v923, 4294901760
  %1134 = vmatmul.f32.gmra.mxu0 %v1133
  %v1135 = vpop.f32.mrf.mxu0
  %v1136 = vadd.f32 %v1049, %v1135
  %v1137 = vand.u32 %v926, 4294901760
  %1138 = vmatmul.f32.gmra.mxu0 %v1137
  %v1139 = vpop.f32.mrf.mxu0
  %v1140 = vadd.f32 %v1057, %v1139
  %1141 = vdwg.mxu0
  %1142 = vmatpush.msra.mxu0 0.0
  %1143 = vmatpush.msra.mxu0 0.0
  %1144 = vmatpush.msra.mxu0 0.0
  %1145 = vmatpush.msra.mxu0 0.0
  %1146 = vmatpush.msra.mxu0 0.0
  %1147 = vmatpush.msra.mxu0 0.0
  %1148 = vmatpush.msra.mxu0 0.0
  %1149 = vmatpush.msra.mxu0 0.0
  %1150 = vmatpush.msra.mxu0 0.0
  %1151 = vmatpush.msra.mxu0 0.0
  %1152 = vmatpush.msra.mxu0 0.0
  %1153 = vmatpush.msra.mxu0 0.0
  %1154 = vmatpush.msra.mxu0 0.0
  %1155 = vmatpush.msra.mxu0 0.0
  %v1156 = vand.u32 %v782, 4294901760
  %v1157 = vsub.f32 %v782, %v1156
  %1158 = vmatpush.msra.mxu0 %v1157
  %v1159 = vand.u32 %v781, 4294901760
  %v1160 = vsub.f32 %v781, %v1159
  %1161 = vmatpush.msra.mxu0 %v1160
  %v1162 = vand.u32 %v887, 4294901760
  %v1163 = vsub.f32 %v887, %v1162
  %1164 = vmatmul.f32.gmra.mxu0 %v1163
  %v1165 = vpop.f32.mrf.mxu0
  %v1166 = vadd.f32 %v1088, %v1165
  %v1167 = vand.u32 %v890, 4294901760
  %v1168 = vsub.f32 %v890, %v1167
  %1169 = vmatmul.f32.gmra.mxu0 %v1168
  %v1170 = vpop.f32.mrf.mxu0
  %v1171 = vadd.f32 %v1092, %v1170
  %v1172 = vand.u32 %v893, 4294901760
  %v1173 = vsub.f32 %v893, %v1172
  %1174 = vmatmul.f32.gmra.mxu0 %v1173
  %v1175 = vpop.f32.mrf.mxu0
  %v1176 = vadd.f32 %v1096, %v1175
  %v1177 = vand.u32 %v896, 4294901760
  %v1178 = vsub.f32 %v896, %v1177
  %1179 = vmatmul.f32.gmra.mxu0 %v1178
  %v1180 = vpop.f32.mrf.mxu0
  %v1181 = vadd.f32 %v1100, %v1180
  %v1182 = vand.u32 %v899, 4294901760
  %v1183 = vsub.f32 %v899, %v1182
  %1184 = vmatmul.f32.gmra.mxu0 %v1183
  %v1185 = vpop.f32.mrf.mxu0
  %v1186 = vadd.f32 %v1104, %v1185
  %v1187 = vand.u32 %v902, 4294901760
  %v1188 = vsub.f32 %v902, %v1187
  %1189 = vmatmul.f32.gmra.mxu0 %v1188
  %v1190 = vpop.f32.mrf.mxu0
  %v1191 = vadd.f32 %v1108, %v1190
  %v1192 = vand.u32 %v905, 4294901760
  %v1193 = vsub.f32 %v905, %v1192
  %1194 = vmatmul.f32.gmra.mxu0 %v1193
  %v1195 = vpop.f32.mrf.mxu0
  %v1196 = vadd.f32 %v1112, %v1195
  %v1197 = vand.u32 %v908, 4294901760
  %v1198 = vsub.f32 %v908, %v1197
  %1199 = vmatmul.f32.gmra.mxu0 %v1198
  %v1200 = vpop.f32.mrf.mxu0
  %v1201 = vadd.f32 %v1116, %v1200
  %v1202 = vand.u32 %v911, 4294901760
  %v1203 = vsub.f32 %v911, %v1202
  %1204 = vmatmul.f32.gmra.mxu0 %v1203
  %v1205 = vpop.f32.mrf.mxu0
  %v1206 = vadd.f32 %v1120, %v1205
  %v1207 = vand.u32 %v914, 4294901760
  %v1208 = vsub.f32 %v914, %v1207
  %1209 = vmatmul.f32.gmra.mxu0 %v1208
  %v1210 = vpop.f32.mrf.mxu0
  %v1211 = vadd.f32 %v1124, %v1210
  %v1212 = vand.u32 %v917, 4294901760
  %v1213 = vsub.f32 %v917, %v1212
  %1214 = vmatmul.f32.gmra.mxu0 %v1213
  %v1215 = vpop.f32.mrf.mxu0
  %v1216 = vadd.f32 %v1128, %v1215
  %v1217 = vand.u32 %v920, 4294901760
  %v1218 = vsub.f32 %v920, %v1217
  %1219 = vmatmul.f32.gmra.mxu0 %v1218
  %v1220 = vpop.f32.mrf.mxu0
  %v1221 = vadd.f32 %v1132, %v1220
  %v1222 = vand.u32 %v923, 4294901760
  %v1223 = vsub.f32 %v923, %v1222
  %1224 = vmatmul.f32.gmra.mxu0 %v1223
  %v1225 = vpop.f32.mrf.mxu0
  %v1226 = vadd.f32 %v1136, %v1225
  %v1227 = vand.u32 %v926, 4294901760
  %v1228 = vsub.f32 %v926, %v1227
  %1229 = vmatmul.f32.gmra.mxu0 %v1228
  %v1230 = vpop.f32.mrf.mxu0
  %v1231 = vadd.f32 %v1140, %v1230
  %1232 = vdwg.mxu0
  %1233 = vmatpush.msra.mxu0 0.0
  %1234 = vmatpush.msra.mxu0 0.0
  %1235 = vmatpush.msra.mxu0 0.0
  %1236 = vmatpush.msra.mxu0 0.0
  %1237 = vmatpush.msra.mxu0 0.0
  %1238 = vmatpush.msra.mxu0 0.0
  %1239 = vmatpush.msra.mxu0 0.0
  %1240 = vmatpush.msra.mxu0 0.0
  %1241 = vmatpush.msra.mxu0 0.0
  %1242 = vmatpush.msra.mxu0 0.0
  %1243 = vmatpush.msra.mxu0 0.0
  %1244 = vmatpush.msra.mxu0 0.0
  %1245 = vmatpush.msra.mxu0 0.0
  %1246 = vmatpush.msra.mxu0 0.0
  %v1247 = vand.u32 %v782, 4294901760
  %1248 = vmatpush.msra.mxu0 %v1247
  %v1249 = vand.u32 %v781, 4294901760
  %1250 = vmatpush.msra.mxu0 %v1249
  %v1251 = vand.u32 %v887, 4294901760
  %v1252 = vsub.f32 %v887, %v1251
  %v1253 = vand.u32 %v1252, 4294901760
  %1254 = vmatmul.f32.gmra.mxu0 %v1253
  %v1255 = vpop.f32.mrf.mxu0
  %v1256 = vadd.f32 %v1166, %v1255
  %v1257 = vand.u32 %v890, 4294901760
  %v1258 = vsub.f32 %v890, %v1257
  %v1259 = vand.u32 %v1258, 4294901760
  %1260 = vmatmul.f32.gmra.mxu0 %v1259
  %v1261 = vpop.f32.mrf.mxu0
  %v1262 = vadd.f32 %v1171, %v1261
  %v1263 = vand.u32 %v893, 4294901760
  %v1264 = vsub.f32 %v893, %v1263
  %v1265 = vand.u32 %v1264, 4294901760
  %1266 = vmatmul.f32.gmra.mxu0 %v1265
  %v1267 = vpop.f32.mrf.mxu0
  %v1268 = vadd.f32 %v1176, %v1267
  %v1269 = vand.u32 %v896, 4294901760
  %v1270 = vsub.f32 %v896, %v1269
  %v1271 = vand.u32 %v1270, 4294901760
  %1272 = vmatmul.f32.gmra.mxu0 %v1271
  %v1273 = vpop.f32.mrf.mxu0
  %v1274 = vadd.f32 %v1181, %v1273
  %v1275 = vand.u32 %v899, 4294901760
  %v1276 = vsub.f32 %v899, %v1275
  %v1277 = vand.u32 %v1276, 4294901760
  %1278 = vmatmul.f32.gmra.mxu0 %v1277
  %v1279 = vpop.f32.mrf.mxu0
  %v1280 = vadd.f32 %v1186, %v1279
  %v1281 = vand.u32 %v902, 4294901760
  %v1282 = vsub.f32 %v902, %v1281
  %v1283 = vand.u32 %v1282, 4294901760
  %1284 = vmatmul.f32.gmra.mxu0 %v1283
  %v1285 = vpop.f32.mrf.mxu0
  %v1286 = vadd.f32 %v1191, %v1285
  %v1287 = vand.u32 %v905, 4294901760
  %v1288 = vsub.f32 %v905, %v1287
  %v1289 = vand.u32 %v1288, 4294901760
  %1290 = vmatmul.f32.gmra.mxu0 %v1289
  %v1291 = vpop.f32.mrf.mxu0
  %v1292 = vadd.f32 %v1196, %v1291
  %v1293 = vand.u32 %v908, 4294901760
  %v1294 = vsub.f32 %v908, %v1293
  %v1295 = vand.u32 %v1294, 4294901760
  %1296 = vmatmul.f32.gmra.mxu0 %v1295
  %v1297 = vpop.f32.mrf.mxu0
  %v1298 = vadd.f32 %v1201, %v1297
  %v1299 = vand.u32 %v911, 4294901760
  %v1300 = vsub.f32 %v911, %v1299
  %v1301 = vand.u32 %v1300, 4294901760
  %1302 = vmatmul.f32.gmra.mxu0 %v1301
  %v1303 = vpop.f32.mrf.mxu0
  %v1304 = vadd.f32 %v1206, %v1303
  %v1305 = vand.u32 %v914, 4294901760
  %v1306 = vsub.f32 %v914, %v1305
  %v1307 = vand.u32 %v1306, 4294901760
  %1308 = vmatmul.f32.gmra.mxu0 %v1307
  %v1309 = vpop.f32.mrf.mxu0
  %v1310 = vadd.f32 %v1211, %v1309
  %v1311 = vand.u32 %v917, 4294901760
  %v1312 = vsub.f32 %v917, %v1311
  %v1313 = vand.u32 %v1312, 4294901760
  %1314 = vmatmul.f32.gmra.mxu0 %v1313
  %v1315 = vpop.f32.mrf.mxu0
  %v1316 = vadd.f32 %v1216, %v1315
  %v1317 = vand.u32 %v920, 4294901760
  %v1318 = vsub.f32 %v920, %v1317
  %v1319 = vand.u32 %v1318, 4294901760
  %1320 = vmatmul.f32.gmra.mxu0 %v1319
  %v1321 = vpop.f32.mrf.mxu0
  %v1322 = vadd.f32 %v1221, %v1321
  %v1323 = vand.u32 %v923, 4294901760
  %v1324 = vsub.f32 %v923, %v1323
  %v1325 = vand.u32 %v1324, 4294901760
  %1326 = vmatmul.f32.gmra.mxu0 %v1325
  %v1327 = vpop.f32.mrf.mxu0
  %v1328 = vadd.f32 %v1226, %v1327
  %v1329 = vand.u32 %v926, 4294901760
  %v1330 = vsub.f32 %v926, %v1329
  %v1331 = vand.u32 %v1330, 4294901760
  %1332 = vmatmul.f32.gmra.mxu0 %v1331
  %v1333 = vpop.f32.mrf.mxu0
  %v1334 = vadd.f32 %v1231, %v1333
  %1335 = vdwg.mxu0
  %1336 = vmatpush.msra.mxu0 0.0
  %1337 = vmatpush.msra.mxu0 0.0
  %1338 = vmatpush.msra.mxu0 0.0
  %1339 = vmatpush.msra.mxu0 0.0
  %1340 = vmatpush.msra.mxu0 0.0
  %1341 = vmatpush.msra.mxu0 0.0
  %1342 = vmatpush.msra.mxu0 0.0
  %1343 = vmatpush.msra.mxu0 0.0
  %1344 = vmatpush.msra.mxu0 0.0
  %1345 = vmatpush.msra.mxu0 0.0
  %1346 = vmatpush.msra.mxu0 0.0
  %1347 = vmatpush.msra.mxu0 0.0
  %1348 = vmatpush.msra.mxu0 0.0
  %1349 = vmatpush.msra.mxu0 0.0
  %v1350 = vand.u32 %v782, 4294901760
  %v1351 = vsub.f32 %v782, %v1350
  %v1352 = vand.u32 %v1351, 4294901760
  %1353 = vmatpush.msra.mxu0 %v1352
  %v1354 = vand.u32 %v781, 4294901760
  %v1355 = vsub.f32 %v781, %v1354
  %v1356 = vand.u32 %v1355, 4294901760
  %1357 = vmatpush.msra.mxu0 %v1356
  %v1358 = vand.u32 %v887, 4294901760
  %1359 = vmatmul.f32.gmra.mxu0 %v1358
  %v1360 = vpop.f32.mrf.mxu0
  %v1361 = vadd.f32 %v1256, %v1360
  %v1362 = vand.u32 %v890, 4294901760
  %1363 = vmatmul.f32.gmra.mxu0 %v1362
  %v1364 = vpop.f32.mrf.mxu0
  %v1365 = vadd.f32 %v1262, %v1364
  %v1366 = vand.u32 %v893, 4294901760
  %1367 = vmatmul.f32.gmra.mxu0 %v1366
  %v1368 = vpop.f32.mrf.mxu0
  %v1369 = vadd.f32 %v1268, %v1368
  %v1370 = vand.u32 %v896, 4294901760
  %1371 = vmatmul.f32.gmra.mxu0 %v1370
  %v1372 = vpop.f32.mrf.mxu0
  %v1373 = vadd.f32 %v1274, %v1372
  %v1374 = vand.u32 %v899, 4294901760
  %1375 = vmatmul.f32.gmra.mxu0 %v1374
  %v1376 = vpop.f32.mrf.mxu0
  %v1377 = vadd.f32 %v1280, %v1376
  %v1378 = vand.u32 %v902, 4294901760
  %1379 = vmatmul.f32.gmra.mxu0 %v1378
  %v1380 = vpop.f32.mrf.mxu0
  %v1381 = vadd.f32 %v1286, %v1380
  %v1382 = vand.u32 %v905, 4294901760
  %1383 = vmatmul.f32.gmra.mxu0 %v1382
  %v1384 = vpop.f32.mrf.mxu0
  %v1385 = vadd.f32 %v1292, %v1384
  %v1386 = vand.u32 %v908, 4294901760
  %1387 = vmatmul.f32.gmra.mxu0 %v1386
  %v1388 = vpop.f32.mrf.mxu0
  %v1389 = vadd.f32 %v1298, %v1388
  %v1390 = vand.u32 %v911, 4294901760
  %1391 = vmatmul.f32.gmra.mxu0 %v1390
  %v1392 = vpop.f32.mrf.mxu0
  %v1393 = vadd.f32 %v1304, %v1392
  %v1394 = vand.u32 %v914, 4294901760
  %1395 = vmatmul.f32.gmra.mxu0 %v1394
  %v1396 = vpop.f32.mrf.mxu0
  %v1397 = vadd.f32 %v1310, %v1396
  %v1398 = vand.u32 %v917, 4294901760
  %1399 = vmatmul.f32.gmra.mxu0 %v1398
  %v1400 = vpop.f32.mrf.mxu0
  %v1401 = vadd.f32 %v1316, %v1400
  %v1402 = vand.u32 %v920, 4294901760
  %1403 = vmatmul.f32.gmra.mxu0 %v1402
  %v1404 = vpop.f32.mrf.mxu0
  %v1405 = vadd.f32 %v1322, %v1404
  %v1406 = vand.u32 %v923, 4294901760
  %1407 = vmatmul.f32.gmra.mxu0 %v1406
  %v1408 = vpop.f32.mrf.mxu0
  %v1409 = vadd.f32 %v1328, %v1408
  %v1410 = vand.u32 %v926, 4294901760
  %1411 = vmatmul.f32.gmra.mxu0 %v1410
  %v1412 = vpop.f32.mrf.mxu0
  %v1413 = vadd.f32 %v1334, %v1412
  %1414 = vdwg.mxu0
  %1415 = vmatpush.msra.mxu0 0.0
  %1416 = vmatpush.msra.mxu0 0.0
  %1417 = vmatpush.msra.mxu0 0.0
  %1418 = vmatpush.msra.mxu0 0.0
  %1419 = vmatpush.msra.mxu0 0.0
  %1420 = vmatpush.msra.mxu0 0.0
  %1421 = vmatpush.msra.mxu0 0.0
  %1422 = vmatpush.msra.mxu0 0.0
  %1423 = vmatpush.msra.mxu0 0.0
  %1424 = vmatpush.msra.mxu0 0.0
  %1425 = vmatpush.msra.mxu0 0.0
  %1426 = vmatpush.msra.mxu0 0.0
  %1427 = vmatpush.msra.mxu0 0.0
  %1428 = vmatpush.msra.mxu0 0.0
  %v1429 = vand.u32 %v782, 4294901760
  %1430 = vmatpush.msra.mxu0 %v1429
  %v1431 = vand.u32 %v781, 4294901760
  %1432 = vmatpush.msra.mxu0 %v1431
  %v1433 = vand.u32 %v887, 4294901760
  %1434 = vmatmul.f32.gmra.mxu0 %v1433
  %v1435 = vpop.f32.mrf.mxu0
  %v1436 = vadd.f32 %v1361, %v1435
  %v1437 = vand.u32 %v890, 4294901760
  %1438 = vmatmul.f32.gmra.mxu0 %v1437
  %v1439 = vpop.f32.mrf.mxu0
  %v1440 = vadd.f32 %v1365, %v1439
  %v1441 = vand.u32 %v893, 4294901760
  %1442 = vmatmul.f32.gmra.mxu0 %v1441
  %v1443 = vpop.f32.mrf.mxu0
  %v1444 = vadd.f32 %v1369, %v1443
  %v1445 = vand.u32 %v896, 4294901760
  %1446 = vmatmul.f32.gmra.mxu0 %v1445
  %v1447 = vpop.f32.mrf.mxu0
  %v1448 = vadd.f32 %v1373, %v1447
  %v1449 = vand.u32 %v899, 4294901760
  %1450 = vmatmul.f32.gmra.mxu0 %v1449
  %v1451 = vpop.f32.mrf.mxu0
  %v1452 = vadd.f32 %v1377, %v1451
  %v1453 = vand.u32 %v902, 4294901760
  %1454 = vmatmul.f32.gmra.mxu0 %v1453
  %v1455 = vpop.f32.mrf.mxu0
  %v1456 = vadd.f32 %v1381, %v1455
  %v1457 = vand.u32 %v905, 4294901760
  %1458 = vmatmul.f32.gmra.mxu0 %v1457
  %v1459 = vpop.f32.mrf.mxu0
  %v1460 = vadd.f32 %v1385, %v1459
  %v1461 = vand.u32 %v908, 4294901760
  %1462 = vmatmul.f32.gmra.mxu0 %v1461
  %v1463 = vpop.f32.mrf.mxu0
  %v1464 = vadd.f32 %v1389, %v1463
  %v1465 = vand.u32 %v911, 4294901760
  %1466 = vmatmul.f32.gmra.mxu0 %v1465
  %v1467 = vpop.f32.mrf.mxu0
  %v1468 = vadd.f32 %v1393, %v1467
  %v1469 = vand.u32 %v914, 4294901760
  %1470 = vmatmul.f32.gmra.mxu0 %v1469
  %v1471 = vpop.f32.mrf.mxu0
  %v1472 = vadd.f32 %v1397, %v1471
  %v1473 = vand.u32 %v917, 4294901760
  %1474 = vmatmul.f32.gmra.mxu0 %v1473
  %v1475 = vpop.f32.mrf.mxu0
  %v1476 = vadd.f32 %v1401, %v1475
  %v1477 = vand.u32 %v920, 4294901760
  %1478 = vmatmul.f32.gmra.mxu0 %v1477
  %v1479 = vpop.f32.mrf.mxu0
  %v1480 = vadd.f32 %v1405, %v1479
  %v1481 = vand.u32 %v923, 4294901760
  %1482 = vmatmul.f32.gmra.mxu0 %v1481
  %v1483 = vpop.f32.mrf.mxu0
  %v1484 = vadd.f32 %v1409, %v1483
  %v1485 = vand.u32 %v926, 4294901760
  %1486 = vmatmul.f32.gmra.mxu0 %v1485
  %v1487 = vpop.f32.mrf.mxu0
  %v1488 = vadd.f32 %v1413, %v1487
  %1489 = vdwg.mxu0
  %v1490 = vadd.f32 %v1436, 3.0
  %v1491 = vadd.f32 %v1440, 3.0
  %v1492 = vadd.f32 %v1444, 3.0
  %v1493 = vadd.f32 %v1448, 3.0
  %v1494 = vadd.f32 %v1452, 3.0
  %v1495 = vadd.f32 %v1456, 3.0
  %v1496 = vadd.f32 %v1460, 3.0
  %v1497 = vadd.f32 %v1464, 3.0
  %v1498 = vadd.f32 %v1468, 3.0
  %v1499 = vadd.f32 %v1472, 3.0
  %v1500 = vadd.f32 %v1476, 3.0
  %v1501 = vadd.f32 %v1480, 3.0
  %v1502 = vadd.f32 %v1484, 3.0
  %v1503 = vadd.f32 %v1488, 3.0
  %v1504 = vmax.f32 %v1490, 0.0
  %v1505 = vmax.f32 %v1491, 0.0
  %v1506 = vmax.f32 %v1492, 0.0
  %v1507 = vmax.f32 %v1493, 0.0
  %v1508 = vmax.f32 %v1494, 0.0
  %v1509 = vmax.f32 %v1495, 0.0
  %v1510 = vmax.f32 %v1496, 0.0
  %v1511 = vmax.f32 %v1497, 0.0
  %v1512 = vmax.f32 %v1498, 0.0
  %v1513 = vmax.f32 %v1499, 0.0
  %v1514 = vmax.f32 %v1500, 0.0
  %v1515 = vmax.f32 %v1501, 0.0
  %v1516 = vmax.f32 %v1502, 0.0
  %v1517 = vmax.f32 %v1503, 0.0
  %v1518 = vmin.f32 %v1504, 6.0
  %v1519 = vmin.f32 %v1505, 6.0
  %v1520 = vmin.f32 %v1506, 6.0
  %v1521 = vmin.f32 %v1507, 6.0
  %v1522 = vmin.f32 %v1508, 6.0
  %v1523 = vmin.f32 %v1509, 6.0
  %v1524 = vmin.f32 %v1510, 6.0
  %v1525 = vmin.f32 %v1511, 6.0
  %v1526 = vmin.f32 %v1512, 6.0
  %v1527 = vmin.f32 %v1513, 6.0
  %v1528 = vmin.f32 %v1514, 6.0
  %v1529 = vmin.f32 %v1515, 6.0
  %v1530 = vmin.f32 %v1516, 6.0
  %v1531 = vmin.f32 %v1517, 6.0
  %v1532 = vmul.f32 %v1436, %v1518
  %v1533 = vmul.f32 %v1440, %v1519
  %v1534 = vmul.f32 %v1444, %v1520
  %v1535 = vmul.f32 %v1448, %v1521
  %v1536 = vmul.f32 %v1452, %v1522
  %v1537 = vmul.f32 %v1456, %v1523
  %v1538 = vmul.f32 %v1460, %v1524
  %v1539 = vmul.f32 %v1464, %v1525
  %v1540 = vmul.f32 %v1468, %v1526
  %v1541 = vmul.f32 %v1472, %v1527
  %v1542 = vmul.f32 %v1476, %v1528
  %v1543 = vmul.f32 %v1480, %v1529
  %v1544 = vmul.f32 %v1484, %v1530
  %v1545 = vmul.f32 %v1488, %v1531
  %v1546 = vmul.f32 %v1532, 0.16666667
  %v1547 = vmul.f32 %v1533, 0.16666667
  %v1548 = vmul.f32 %v1534, 0.16666667
  %v1549 = vmul.f32 %v1535, 0.16666667
  %v1550 = vmul.f32 %v1536, 0.16666667
  %v1551 = vmul.f32 %v1537, 0.16666667
  %v1552 = vmul.f32 %v1538, 0.16666667
  %v1553 = vmul.f32 %v1539, 0.16666667
  %v1554 = vmul.f32 %v1540, 0.16666667
  %v1555 = vmul.f32 %v1541, 0.16666667
  %v1556 = vmul.f32 %v1542, 0.16666667
  %v1557 = vmul.f32 %v1543, 0.16666667
  %v1558 = vmul.f32 %v1544, 0.16666667
  %v1559 = vmul.f32 %v1545, 0.16666667
  %vm1560 = vcmask 146432
  %1561 = vst.msk [vmem:[%s5] sm:$0xff] %vm1560, %v1546
  %1562 = vst.msk [vmem:[%s5 + $0x8] sm:$0xff] %vm1560, %v1547
  %1563 = vst.msk [vmem:[%s5 + $0x10] sm:$0xff] %vm1560, %v1548
  %1564 = vst.msk [vmem:[%s5 + $0x18] sm:$0xff] %vm1560, %v1549
  %1565 = vst.msk [vmem:[%s5 + $0x20] sm:$0xff] %vm1560, %v1550
  %1566 = vst.msk [vmem:[%s5 + $0x28] sm:$0xff] %vm1560, %v1551
  %1567 = vst.msk [vmem:[%s5 + $0x30] sm:$0xff] %vm1560, %v1552
  %1568 = vst.msk [vmem:[%s5 + $0x38] sm:$0xff] %vm1560, %v1553
  %1569 = vst.msk [vmem:[%s5 + $0x40] sm:$0xff] %vm1560, %v1554
  %1570 = vst.msk [vmem:[%s5 + $0x48] sm:$0xff] %vm1560, %v1555
  %1571 = vst.msk [vmem:[%s5 + $0x50] sm:$0xff] %vm1560, %v1556
  %1572 = vst.msk [vmem:[%s5 + $0x58] sm:$0xff] %vm1560, %v1557
  %1573 = vst.msk [vmem:[%s5 + $0x60] sm:$0xff] %vm1560, %v1558
  %vm1574 = vcmask 142336
  %1575 = vst.msk [vmem:[%s5 + $0x68] sm:$0xf] %vm1574, %v1559
  // Predicated region
  $region22: #{tpu_custom_call.1} parent=0 // pred_check
    _
  $region23: #{tpu_custom_call.1} parent=0 // pred_check_branch
    %1577 = sbr.rel (0) target = $region25
  $region24: #{tpu_custom_call.1} parent=0 // pred_region
    _
  $region25: #{tpu_custom_call.1} parent=0 // pred_fallthru
    _
  // Predicated region
  $region26: #{tpu_custom_call.1} parent=0 // pred_check
    _
  $region27: #{tpu_custom_call.1} parent=0 // pred_check_branch
    %1579 = sbr.rel (0) target = $region29
  $region28: #{tpu_custom_call.1} parent=0 // pred_region
    _
  $region29: #{tpu_custom_call.1} parent=0 // pred_fallthru
    _

</llo_original>
